<compile_context>
chip_gen: v6e
topology: v6e:2x2x1
jax: 0.10.0
libtpu: 0.0.40
codegen_flags: <defaults>
</compile_context>

<pallas_src>
import functools

import jax
import jax.numpy as jnp
from jax import lax
from jax.experimental import pallas as pl
from jax.experimental.pallas import tpu as pltpu


# ----------------------------------------------------------------------------
# Kernel
# ----------------------------------------------------------------------------
def _widedeep_kernel(xw_ref, xn_ref, xc_ref,
                     w1n_ref, tcat_ref, b1_ref,
                     w2_ref, b2_ref,
                     w3row_ref, wwide_ref, bout_ref,
                     out_ref):
    TB = xw_ref.shape[0]
    NC = tcat_ref.shape[0]          # padded total number of categories (mult of 128)

    # ---- multi-hot lookup matrix for the categorical embeddings ----------
    # xc is pre-offset host-side so each column indexes a disjoint row range
    # of the fused table `tcat` (embeddings already folded through W1 & BN1).
    ids = xc_ref[...]                                        # (TB, n2) int32
    lanes = lax.broadcasted_iota(jnp.int32, (TB, NC), 1)     # (TB, NC)
    m = jnp.zeros((TB, NC), jnp.float32)
    for i in range(ids.shape[1]):                            # n2 is static & tiny
        m = m + (lanes == ids[:, i:i + 1]).astype(jnp.float32)

    # ---- hidden layer 1: Linear (+BN0/BN1 folded) -> ReLU -> Dropout(id) --
    h = (jnp.dot(xn_ref[...], w1n_ref[...], preferred_element_type=jnp.float32)
         + jnp.dot(m.astype(jnp.bfloat16), tcat_ref[...],
                   preferred_element_type=jnp.float32)
         + b1_ref[...])
    h = jnp.maximum(h, 0.0)

    # ---- hidden layer 2: Linear (+BN2 folded) -> ReLU -> Dropout(id) ------
    h = (jnp.dot(h.astype(jnp.bfloat16), w2_ref[...],
                 preferred_element_type=jnp.float32) + b2_ref[...])
    h = jnp.maximum(h, 0.0)
    # TODO(synk): training-mode Dropout / batch-statistics BatchNorm not implemented (eval path only).

    # ---- output heads: N=1 Linears as VPU/XLU row dot-products ------------
    deep = jnp.sum(h * w3row_ref[...], axis=-1, keepdims=True)         # (TB, 1)
    wide = jnp.sum(xw_ref[...] * wwide_ref[...], axis=-1, keepdims=True)
    out_ref[...] = wide + deep + bout_ref[...]


# ----------------------------------------------------------------------------
# One-time host-side parameter preparation (BN folding, table fusion, casts)
# ----------------------------------------------------------------------------
def _bn_affine(gamma, beta, mean, var, eps=1e-5):
    scale = gamma / jnp.sqrt(var + eps)
    shift = beta - mean * scale
    return scale, shift


def prepare_widedeep_params(params, *, eps=1e-5):
    """Fold all eval-mode BatchNorms and the embedding tables into the Linear
    weights once; returns kernel-ready (pre-transposed, bf16) arrays."""
    n1 = params["bn0"][0].shape[0]
    E = params["emb"][0].shape[1]
    n2 = len(params["emb"])

    sc0, sh0 = _bn_affine(*params["bn0"], eps=eps)
    s1, t1 = _bn_affine(*params["bn1"], eps=eps)
    s2, t2 = _bn_affine(*params["bn2"], eps=eps)

    w1 = params["w1"]                       # (h1, n1 + n2*E)
    w1n = w1[:, :n1]                        # (h1, n1)
    w1c = w1[:, n1:]                        # (h1, n2*E)

    # BN0 (input affine) + BN1 (output affine) folded into the numeric weights.
    w1n_f = (w1n * sc0[None, :]) * s1[:, None]              # (h1, n1)
    b1_f = s1 * (params["b1"] + w1n @ sh0) + t1             # (h1,)

    # Fold every embedding table through its slice of W1, stack, scale by BN1.
    tables, offsets, off = [], [], 0
    for i in range(n2):
        emb = params["emb"][i]                              # (nc_i, E)
        w1ci = w1c[:, i * E:(i + 1) * E]                    # (h1, E)
        tables.append(emb @ w1ci.T)                         # (nc_i, h1)
        offsets.append(off)
        off += emb.shape[0]
    tcat = jnp.concatenate(tables, axis=0) * s1[None, :]    # (TOT, h1)
    tot = tcat.shape[0]
    nc_pad = ((tot + 127) // 128) * 128
    tcat = jnp.pad(tcat, ((0, nc_pad - tot), (0, 0)))

    # BN2 folded into layer 2.
    w2_f = params["w2"] * s2[:, None]                       # (h2, h1)
    b2_f = s2 * params["b2"] + t2                           # (h2,)

    return {
        "offsets": jnp.asarray(offsets, jnp.int32),             # (n2,)
        "w1n": w1n_f.T.astype(jnp.bfloat16),                    # (n1, h1)
        "tcat": tcat.astype(jnp.bfloat16),                      # (NC_PAD, h1)
        "b1": b1_f[None, :].astype(jnp.float32),                # (1, h1)
        "w2": w2_f.T.astype(jnp.bfloat16),                      # (h1, h2)
        "b2": b2_f[None, :].astype(jnp.float32),                # (1, h2)
        "w3row": params["w3"].astype(jnp.float32),              # (1, h2)
        "widerow": params["wide_w"].astype(jnp.float32),        # (1, d_w)
        "bout": (params["wide_b"] + params["b3"]).reshape(1, 1).astype(jnp.float32),
    }


# ----------------------------------------------------------------------------
# Forward pass
# ----------------------------------------------------------------------------
@functools.partial(jax.jit, static_argnames=("block_b",))
def widedeep_forward(xw, xn, xc, prep, block_b=128):
    """xw: (B, d_w) f32, xn: (B, n1) f32, xc: (B, n2) int32 -> (B, 1) f32."""
    B = xw.shape[0]
    TB = block_b
    B_pad = ((B + TB - 1) // TB) * TB
    pad = B_pad - B

    xw_p = jnp.pad(xw.astype(jnp.float32), ((0, pad), (0, 0)))
    xn_p = jnp.pad(xn.astype(jnp.float32), ((0, pad), (0, 0))).astype(jnp.bfloat16)
    xc_p = jnp.pad(xc.astype(jnp.int32), ((0, pad), (0, 0)))
    xc_off = xc_p + prep["offsets"][None, :]

    d_w = xw_p.shape[1]
    n1 = xn_p.shape[1]
    n2 = xc_off.shape[1]
    nc_pad, h1 = prep["tcat"].shape
    h2 = prep["w2"].shape[1]

    act = lambda i: (i, 0)     # batch-tiled activations / output
    res = lambda i: (0, 0)     # VMEM-resident weights (constant block index)

    in_specs = [
        pl.BlockSpec((TB, d_w), act),
        pl.BlockSpec((TB, n1), act),
        pl.BlockSpec((TB, n2), act),
        pl.BlockSpec((n1, h1), res),
        pl.BlockSpec((nc_pad, h1), res),
        pl.BlockSpec((1, h1), res),
        pl.BlockSpec((h1, h2), res),
        pl.BlockSpec((1, h2), res),
        pl.BlockSpec((1, h2), res),
        pl.BlockSpec((1, d_w), res),
        pl.BlockSpec((1, 1), res),
    ]

    out = pl.pallas_call(
        _widedeep_kernel,
        out_shape=jax.ShapeDtypeStruct((B_pad, 1), jnp.float32),
        grid=(B_pad // TB,),
        in_specs=in_specs,
        out_specs=pl.BlockSpec((TB, 1), act),
        compiler_params=pltpu.CompilerParams(
            dimension_semantics=("parallel",)),
    )(xw_p, xn_p, xc_off,
      prep["w1n"], prep["tcat"], prep["b1"],
      prep["w2"], prep["b2"],
      prep["w3row"], prep["widerow"], prep["bout"])

    return out[:B]


# ----------------------------------------------------------------------------
# Pure-JAX reference (f32, matches the PyTorch eval forward)
# ----------------------------------------------------------------------------
def widedeep_ref(xw, xn, xc, params):
    def bn(x, gamma, beta, mean, var, eps=1e-5):
        return (x - mean) / jnp.sqrt(var + eps) * gamma + beta

    wide = xw @ params["wide_w"].T + params["wide_b"]
    num = bn(xn, *params["bn0"])
    cats = jnp.concatenate(
        [params["emb"][i][xc[:, i]] for i in range(xc.shape[1])], axis=1)
    x = jnp.concatenate([num, cats], axis=1)
    h = jax.nn.relu(bn(x @ params["w1"].T + params["b1"], *params["bn1"]))
    h = jax.nn.relu(bn(h @ params["w2"].T + params["b2"], *params["bn2"]))
    deep = h @ params["w3"].T + params["b3"]
    return wide + deep


def make_params(key, wide_num_feature, deep_num_feature, num_classes,
                hidden_units, embed_dim):
    keys = jax.random.split(key, 32)
    k = iter(keys)

    def lin(kw, kb, fan_in, fan_out):
        bound = 1.0 / jnp.sqrt(fan_in)
        w = jax.random.uniform(kw, (fan_out, fan_in), jnp.float32, -bound, bound)
        b = jax.random.uniform(kb, (fan_out,), jnp.float32, -bound, bound)
        return w, b

    def bn(kg, kb, km, kv, n):
        gamma = 1.0 + 0.1 * jax.random.normal(kg, (n,), jnp.float32)
        beta = 0.1 * jax.random.normal(kb, (n,), jnp.float32)
        mean = 0.1 * jax.random.normal(km, (n,), jnp.float32)
        var = 0.5 + jnp.abs(jax.random.normal(kv, (n,), jnp.float32))
        return (gamma, beta, mean, var)

    params = {}
    params["wide_w"], params["wide_b"] = lin(next(k), next(k), wide_num_feature, 1)
    params["bn0"] = bn(next(k), next(k), next(k), next(k), deep_num_feature)
    params["emb"] = [jax.random.normal(next(k), (nc, embed_dim), jnp.float32)
                     for nc in num_classes]
    d_in = embed_dim * len(num_classes) + deep_num_feature
    params["w1"], params["b1"] = lin(next(k), next(k), d_in, hidden_units[0])
    params["bn1"] = bn(next(k), next(k), next(k), next(k), hidden_units[0])
    params["w2"], params["b2"] = lin(next(k), next(k), hidden_units[0], hidden_units[1])
    params["bn2"] = bn(next(k), next(k), next(k), next(k), hidden_units[1])
    params["w3"], params["b3"] = lin(next(k), next(k), hidden_units[1], 1)
    return params


if __name__ == "__main__":
    B = 256
    wide_num_feature = 16      # d_w
    deep_num_feature = 8       # n1
    num_classes = [11, 7, 19]  # n2 = 3
    embed_dim = 16
    hidden_units = [64, 32]

    key = jax.random.PRNGKey(0)
    kp, kw, kn, kc = jax.random.split(key, 4)

    params = make_params(kp, wide_num_feature, deep_num_feature,
                         num_classes, hidden_units, embed_dim)

    xw = jax.random.normal(kw, (B, wide_num_feature), jnp.float32)
    xn = jax.random.normal(kn, (B, deep_num_feature), jnp.float32)
    xc = jnp.stack(
        [jax.random.randint(jax.random.fold_in(kc, i), (B,), 0, nc)
         for i, nc in enumerate(num_classes)], axis=1).astype(jnp.int32)

    prep = prepare_widedeep_params(params)      # one-time host-side folding
    out = widedeep_forward(xw, xn, xc, prep)
    out = jax.block_until_ready(out)

    ref = widedeep_ref(xw, xn, xc, params)
    assert out.shape == (B, 1)
    max_err = float(jnp.max(jnp.abs(out - ref)))
    # bf16 MXU operands (f32 accumulation) loosen the tolerance vs the pure
    # f32 reference; structural bugs would be O(1), so 5e-2 is a tight check.
    assert max_err < 5e-2, (max_err, out[:4], ref[:4])
    print("KERNEL_OK")
</pallas_src>

<mosaic_0001>
module attributes {stable_mosaic.version = 11 : i64} {
  func.func @_widedeep_kernel(%arg0: i32, %arg1: memref<128x16xf32, #tpu.memory_space<vmem>>, %arg2: memref<128x8xbf16, #tpu.memory_space<vmem>>, %arg3: memref<128x3xi32, #tpu.memory_space<vmem>>, %arg4: memref<8x64xbf16, #tpu.memory_space<vmem>>, %arg5: memref<128x64xbf16, #tpu.memory_space<vmem>>, %arg6: memref<1x64xf32, #tpu.memory_space<vmem>>, %arg7: memref<64x32xbf16, #tpu.memory_space<vmem>>, %arg8: memref<1x32xf32, #tpu.memory_space<vmem>>, %arg9: memref<1x32xf32, #tpu.memory_space<vmem>>, %arg10: memref<1x16xf32, #tpu.memory_space<vmem>>, %arg11: memref<1x1xf32, #tpu.memory_space<vmem>>, %arg12: memref<128x1xf32, #tpu.memory_space<vmem>>) attributes {dimension_semantics = [#tpu.dimension_semantics<parallel>], iteration_bounds = array<i64: 2>, scalar_prefetch = 0 : i64, scratch_operands = 0 : i64, tpu.core_type = #tpu.core_type<tc>, window_params = [{transform_indices = @transform_0, window_bounds = array<i64: 128, 16>}, {transform_indices = @transform_1, window_bounds = array<i64: 128, 8>}, {transform_indices = @transform_2, window_bounds = array<i64: 128, 3>}, {pipeline_mode = #tpu.pipeline_mode<synchronous>, transform_indices = @transform_3, window_bounds = array<i64: 8, 64>}, {pipeline_mode = #tpu.pipeline_mode<synchronous>, transform_indices = @transform_4, window_bounds = array<i64: 128, 64>}, {pipeline_mode = #tpu.pipeline_mode<synchronous>, transform_indices = @transform_5, window_bounds = array<i64: 1, 64>}, {pipeline_mode = #tpu.pipeline_mode<synchronous>, transform_indices = @transform_6, window_bounds = array<i64: 64, 32>}, {pipeline_mode = #tpu.pipeline_mode<synchronous>, transform_indices = @transform_7, window_bounds = array<i64: 1, 32>}, {pipeline_mode = #tpu.pipeline_mode<synchronous>, transform_indices = @transform_8, window_bounds = array<i64: 1, 32>}, {pipeline_mode = #tpu.pipeline_mode<synchronous>, transform_indices = @transform_9, window_bounds = array<i64: 1, 16>}, {pipeline_mode = #tpu.pipeline_mode<synchronous>, transform_indices = @transform_10, window_bounds = array<i64: 1, 1>}, {transform_indices = @transform_11, window_bounds = array<i64: 128, 1>}]} {
    %c0 = arith.constant 0 : index
    %c0_0 = arith.constant 0 : index
    %0 = vector.load %arg3[%c0, %c0_0] : memref<128x3xi32, #tpu.memory_space<vmem>>, vector<128x3xi32>
    %1 = tpu.iota {dimensions = array<i32: 1>} : vector<128x128xi32>
    %cst = arith.constant 0.000000e+00 : f32
    %2 = vector.broadcast %cst : f32 to vector<128x128xf32>
    %3 = vector.extract_strided_slice %0 {offsets = [0, 0], sizes = [128, 1], strides = [1, 1]} : vector<128x3xi32> to vector<128x1xi32>
    %4 = vector.broadcast %3 : vector<128x1xi32> to vector<128x128xi32>
    %5 = arith.cmpi eq, %1, %4 : vector<128x128xi32>
    %6 = arith.extui %5 : vector<128x128xi1> to vector<128x128xi32>
    %7 = arith.sitofp %6 : vector<128x128xi32> to vector<128x128xf32>
    %8 = arith.addf %2, %7 : vector<128x128xf32>
    %9 = vector.extract_strided_slice %0 {offsets = [0, 1], sizes = [128, 1], strides = [1, 1]} : vector<128x3xi32> to vector<128x1xi32>
    %10 = vector.broadcast %9 : vector<128x1xi32> to vector<128x128xi32>
    %11 = arith.cmpi eq, %1, %10 : vector<128x128xi32>
    %12 = arith.extui %11 : vector<128x128xi1> to vector<128x128xi32>
    %13 = arith.sitofp %12 : vector<128x128xi32> to vector<128x128xf32>
    %14 = arith.addf %8, %13 : vector<128x128xf32>
    %15 = vector.extract_strided_slice %0 {offsets = [0, 2], sizes = [128, 1], strides = [1, 1]} : vector<128x3xi32> to vector<128x1xi32>
    %16 = vector.broadcast %15 : vector<128x1xi32> to vector<128x128xi32>
    %17 = arith.cmpi eq, %1, %16 : vector<128x128xi32>
    %18 = arith.extui %17 : vector<128x128xi1> to vector<128x128xi32>
    %19 = arith.sitofp %18 : vector<128x128xi32> to vector<128x128xf32>
    %20 = arith.addf %14, %19 : vector<128x128xf32>
    %c0_1 = arith.constant 0 : index
    %c0_2 = arith.constant 0 : index
    %21 = vector.load %arg2[%c0_1, %c0_2] : memref<128x8xbf16, #tpu.memory_space<vmem>>, vector<128x8xbf16>
    %c0_3 = arith.constant 0 : index
    %c0_4 = arith.constant 0 : index
    %22 = vector.load %arg4[%c0_3, %c0_4] : memref<8x64xbf16, #tpu.memory_space<vmem>>, vector<8x64xbf16>
    %cst_5 = arith.constant dense<0.000000e+00> : vector<128x64xf32>
    %23 = tpu.matmul %21, %22, %cst_5 {dimension_numbers = #tpu.dot_dimension_numbers<[1], [0], [0], [1], [0, 0, 1, 1], [], []>} : vector<128x8xbf16>, vector<8x64xbf16>, vector<128x64xf32> -> vector<128x64xf32>
    %24 = arith.truncf %20 : vector<128x128xf32> to vector<128x128xbf16>
    %c0_6 = arith.constant 0 : index
    %c0_7 = arith.constant 0 : index
    %25 = vector.load %arg5[%c0_6, %c0_7] : memref<128x64xbf16, #tpu.memory_space<vmem>>, vector<128x64xbf16>
    %cst_8 = arith.constant dense<0.000000e+00> : vector<128x64xf32>
    %26 = tpu.matmul %24, %25, %cst_8 {dimension_numbers = #tpu.dot_dimension_numbers<[1], [0], [0], [1], [0, 0, 1, 1], [], []>} : vector<128x128xbf16>, vector<128x64xbf16>, vector<128x64xf32> -> vector<128x64xf32>
    %27 = arith.addf %23, %26 : vector<128x64xf32>
    %c0_9 = arith.constant 0 : index
    %c0_10 = arith.constant 0 : index
    %28 = vector.load %arg6[%c0_9, %c0_10] : memref<1x64xf32, #tpu.memory_space<vmem>>, vector<1x64xf32>
    %29 = vector.broadcast %28 : vector<1x64xf32> to vector<128x64xf32>
    %30 = arith.addf %27, %29 : vector<128x64xf32>
    %cst_11 = arith.constant 0.000000e+00 : f32
    %31 = vector.broadcast %cst_11 : f32 to vector<128x64xf32>
    %32 = arith.maximumf %30, %31 : vector<128x64xf32>
    %33 = arith.truncf %32 : vector<128x64xf32> to vector<128x64xbf16>
    %c0_12 = arith.constant 0 : index
    %c0_13 = arith.constant 0 : index
    %34 = vector.load %arg7[%c0_12, %c0_13] : memref<64x32xbf16, #tpu.memory_space<vmem>>, vector<64x32xbf16>
    %cst_14 = arith.constant dense<0.000000e+00> : vector<128x32xf32>
    %35 = tpu.matmul %33, %34, %cst_14 {dimension_numbers = #tpu.dot_dimension_numbers<[1], [0], [0], [1], [0, 0, 1, 1], [], []>} : vector<128x64xbf16>, vector<64x32xbf16>, vector<128x32xf32> -> vector<128x32xf32>
    %c0_15 = arith.constant 0 : index
    %c0_16 = arith.constant 0 : index
    %36 = vector.load %arg8[%c0_15, %c0_16] : memref<1x32xf32, #tpu.memory_space<vmem>>, vector<1x32xf32>
    %37 = vector.broadcast %36 : vector<1x32xf32> to vector<128x32xf32>
    %38 = arith.addf %35, %37 : vector<128x32xf32>
    %cst_17 = arith.constant 0.000000e+00 : f32
    %39 = vector.broadcast %cst_17 : f32 to vector<128x32xf32>
    %40 = arith.maximumf %38, %39 : vector<128x32xf32>
    %c0_18 = arith.constant 0 : index
    %c0_19 = arith.constant 0 : index
    %41 = vector.load %arg9[%c0_18, %c0_19] : memref<1x32xf32, #tpu.memory_space<vmem>>, vector<1x32xf32>
    %42 = vector.broadcast %41 : vector<1x32xf32> to vector<128x32xf32>
    %43 = arith.mulf %40, %42 : vector<128x32xf32>
    %cst_20 = arith.constant dense<0.000000e+00> : vector<128xf32>
    %44 = vector.multi_reduction <add>, %43, %cst_20 [1] : vector<128x32xf32> to vector<128xf32>
    %45 = vector.shape_cast %44 : vector<128xf32> to vector<128x1xf32>
    %c0_21 = arith.constant 0 : index
    %c0_22 = arith.constant 0 : index
    %46 = vector.load %arg1[%c0_21, %c0_22] : memref<128x16xf32, #tpu.memory_space<vmem>>, vector<128x16xf32>
    %c0_23 = arith.constant 0 : index
    %c0_24 = arith.constant 0 : index
    %47 = vector.load %arg10[%c0_23, %c0_24] : memref<1x16xf32, #tpu.memory_space<vmem>>, vector<1x16xf32>
    %48 = vector.broadcast %47 : vector<1x16xf32> to vector<128x16xf32>
    %49 = arith.mulf %46, %48 : vector<128x16xf32>
    %cst_25 = arith.constant dense<0.000000e+00> : vector<128xf32>
    %50 = vector.multi_reduction <add>, %49, %cst_25 [1] : vector<128x16xf32> to vector<128xf32>
    %51 = vector.shape_cast %50 : vector<128xf32> to vector<128x1xf32>
    %52 = arith.addf %51, %45 : vector<128x1xf32>
    %c0_26 = arith.constant 0 : index
    %c0_27 = arith.constant 0 : index
    %53 = vector.load %arg11[%c0_26, %c0_27] : memref<1x1xf32, #tpu.memory_space<vmem>>, vector<1x1xf32>
    %54 = vector.broadcast %53 : vector<1x1xf32> to vector<128x1xf32>
    %55 = arith.addf %52, %54 : vector<128x1xf32>
    %c0_28 = arith.constant 0 : index
    %c0_29 = arith.constant 0 : index
    %56 = vector.load %arg12[%c0_28, %c0_29] : memref<128x1xf32, #tpu.memory_space<vmem>>, vector<128x1xf32>
    tpu.vector_store %arg12[%c0_28, %c0_29], %55 {strides = array<i32>} : memref<128x1xf32, #tpu.memory_space<vmem>>, vector<128x1xf32>,
    return
  }
  func.func @transform_0(%arg0: i32) -> (i32, i32) {
    %c0_i32 = arith.constant 0 : i32
    %c0_i32_0 = arith.constant 0 : i32
    return %arg0, %c0_i32 : i32, i32
  }
  func.func @transform_1(%arg0: i32) -> (i32, i32) {
    %c0_i32 = arith.constant 0 : i32
    %c0_i32_0 = arith.constant 0 : i32
    return %arg0, %c0_i32 : i32, i32
  }
  func.func @transform_2(%arg0: i32) -> (i32, i32) {
    %c0_i32 = arith.constant 0 : i32
    %c0_i32_0 = arith.constant 0 : i32
    return %arg0, %c0_i32 : i32, i32
  }
  func.func @transform_3(%arg0: i32) -> (i32, i32) {
    %c0_i32 = arith.constant 0 : i32
    %c0_i32_0 = arith.constant 0 : i32
    %c0_i32_1 = arith.constant 0 : i32
    return %c0_i32, %c0_i32_0 : i32, i32
  }
  func.func @transform_4(%arg0: i32) -> (i32, i32) {
    %c0_i32 = arith.constant 0 : i32
    %c0_i32_0 = arith.constant 0 : i32
    %c0_i32_1 = arith.constant 0 : i32
    return %c0_i32, %c0_i32_0 : i32, i32
  }
  func.func @transform_5(%arg0: i32) -> (i32, i32) {
    %c0_i32 = arith.constant 0 : i32
    %c0_i32_0 = arith.constant 0 : i32
    %c0_i32_1 = arith.constant 0 : i32
    return %c0_i32, %c0_i32_0 : i32, i32
  }
  func.func @transform_6(%arg0: i32) -> (i32, i32) {
    %c0_i32 = arith.constant 0 : i32
    %c0_i32_0 = arith.constant 0 : i32
    %c0_i32_1 = arith.constant 0 : i32
    return %c0_i32, %c0_i32_0 : i32, i32
  }
  func.func @transform_7(%arg0: i32) -> (i32, i32) {
    %c0_i32 = arith.constant 0 : i32
    %c0_i32_0 = arith.constant 0 : i32
    %c0_i32_1 = arith.constant 0 : i32
    return %c0_i32, %c0_i32_0 : i32, i32
  }
  func.func @transform_8(%arg0: i32) -> (i32, i32) {
    %c0_i32 = arith.constant 0 : i32
    %c0_i32_0 = arith.constant 0 : i32
    %c0_i32_1 = arith.constant 0 : i32
    return %c0_i32, %c0_i32_0 : i32, i32
  }
  func.func @transform_9(%arg0: i32) -> (i32, i32) {
    %c0_i32 = arith.constant 0 : i32
    %c0_i32_0 = arith.constant 0 : i32
    %c0_i32_1 = arith.constant 0 : i32
    return %c0_i32, %c0_i32_0 : i32, i32
  }
  func.func @transform_10(%arg0: i32) -> (i32, i32) {
    %c0_i32 = arith.constant 0 : i32
    %c0_i32_0 = arith.constant 0 : i32
    %c0_i32_1 = arith.constant 0 : i32
    return %c0_i32, %c0_i32_0 : i32, i32
  }
  func.func @transform_11(%arg0: i32) -> (i32, i32) {
    %c0_i32 = arith.constant 0 : i32
    %c0_i32_0 = arith.constant 0 : i32
    return %arg0, %c0_i32 : i32, i32
  }
}

</mosaic_0001>

<llo_original>
// kernel: widedeep_forward.1
$region0: #{widedeep_forward.1}
  #allocation0 [shape = 'u32[]', space=smem, size = 0x4, offset = 0x4, fixed_abs, tag = 'smem constant byte address 0x4 - core index']
  #allocation1 [shape = 'u32[144,128]{1,0:T(1,128)}', space=vmem, size = 0x12000, scoped, tag = 'internal scratch']
  #allocation2 [shape = 'f32[1,1]{1,0:T(1,128)S(1)}', space=vmem, size = 0x200, scoped, tag = 'scoped memory for widedeep_forward.1']
  %s0 = inlined_call_operand.vmem [shape: f32[256,16], index: 0, kind: input, shape index: {}]
  %s1 = inlined_call_operand.vmem [shape: bf16[256,8], index: 1, kind: input, shape index: {}]
  %s2 = inlined_call_operand.vmem [shape: s32[256,3], index: 2, kind: input, shape index: {}]
  %s3 = inlined_call_operand.vmem [shape: bf16[8,64], index: 3, kind: input, shape index: {}]
  %s4 = inlined_call_operand.vmem [shape: bf16[128,64], index: 4, kind: input, shape index: {}]
  %s5 = inlined_call_operand.vmem [shape: f32[1,64], index: 5, kind: input, shape index: {}]
  %s6 = inlined_call_operand.vmem [shape: bf16[64,32], index: 6, kind: input, shape index: {}]
  %s7 = inlined_call_operand.vmem [shape: f32[1,32], index: 7, kind: input, shape index: {}]
  %s8 = inlined_call_operand.vmem [shape: f32[1,32], index: 8, kind: input, shape index: {}]
  %s9 = inlined_call_operand.vmem [shape: f32[1,16], index: 9, kind: input, shape index: {}]
  %s10 = inlined_call_operand.<no memory space> [shape: f32[1,1], index: 10, kind: input, shape index: {}]
  %s11 = inlined_call_operand.vmem [shape: f32[256,1], index: 11, kind: output, shape index: {}]
  %s12 = sld [smem:[#allocation0]]
  $region77: #{widedeep_forward.1} parent=0
    _
  %s14 = ssub.s32 1, %s12
  %s15 = scalar_select 0, %s14, %s12
  %v16 = vstv %s10
  %17 = vst [vmem:[#allocation2] sm:$0x1] %v16
  loop: start=0, step=1, limit=4
  $region2: #{widedeep_forward.1} parent=0 // loop_pre_header
    _
  $region3: #{widedeep_forward.1} parent=0 // loop_header
    %s19 = sphi 0, %s23
    %p20 = scmp.ge.s32.totalorder %s19, 4
    %s29 = sphi 0, %s31
    %s32 = sphi 0, %s29
    %s33 = sphi 0, %s32
    %s49 = sphi 0, %s33
    %s55 = sphi 0, %s57
    %s58 = sphi 0, %s55
    %s59 = sphi 0, %s58
    %s75 = sphi 0, %s59
    %s81 = sphi 0, %s83
    %s84 = sphi 0, %s81
    %s85 = sphi 0, %s84
    %s101 = sphi 0, %s85
    %s105 = sphi 0, %s105
    %s107 = sphi 0, %s105
    %s108 = sphi 0, %s107
    %s122 = sphi 0, %s108
    %s126 = sphi 0, %s126
    %s128 = sphi 0, %s126
    %s129 = sphi 0, %s128
    %s143 = sphi 0, %s129
    %s147 = sphi 0, %s147
    %s149 = sphi 0, %s147
    %s150 = sphi 0, %s149
    %s164 = sphi 0, %s150
    %s168 = sphi 0, %s168
    %s170 = sphi 0, %s168
    %s171 = sphi 0, %s170
    %s185 = sphi 0, %s171
    %s189 = sphi 0, %s189
    %s191 = sphi 0, %s189
    %s192 = sphi 0, %s191
    %s206 = sphi 0, %s192
    %s210 = sphi 0, %s210
    %s212 = sphi 0, %s210
    %s213 = sphi 0, %s212
    %s227 = sphi 0, %s213
    %s231 = sphi 0, %s231
    %s233 = sphi 0, %s231
    %s234 = sphi 0, %s233
    %s248 = sphi 0, %s234
    %s252 = sphi 0, %s252
    %s254 = sphi 0, %s252
    %s255 = sphi 0, %s254
    %s269 = sphi 0, %s255
    %s275 = sphi 0, %s277
    %s278 = sphi 0, %s275
    %s279 = sphi 0, %s278
    %s295 = sphi 0, %s279
  $region4: #{widedeep_forward.1} parent=0 // loop_header_branch
    %22 = sbr.rel (%p20) target = $region8
  $region5: #{widedeep_forward.1} parent=0 // loop_body
    %s24 = ssub.s32 %s19, 1
    %s25 = ssub.s32 %s19, 2
    %s26 = sadd.s32 %s19, 1
    %s27 = ssub.s32 %s19, %s26
    %p28 = scmp.eq.s32.totalorder %s27, 0
    %s30 = sadd.s32 %s29, 1
    %s31 = scalar_select %p28, %s29, %s30
    %p34 = pneg %p28
    %p35 = scmp.eq.s32.totalorder %s19, 1
    %p36 = por %p34, %p35
    %p37 = scmp.ne.s32.totalorder %s29, %s32
    %p38 = scmp.eq.s32.totalorder %s19, 0
    %p39 = por %p37, %p38
    %p40 = scmp.ne.s32.totalorder %s29, %s32
    %p41 = scmp.eq.s32.totalorder %s24, 1
    %p42 = por %p40, %p41
    %p43 = scmp.ne.s32.totalorder %s32, %s33
    %p44 = scmp.eq.s32.totalorder %s24, 0
    %p45 = por %p43, %p44
    %p46 = scmp.ne.s32.totalorder %s32, %s33
    %p47 = scmp.eq.s32.totalorder %s25, 1
    %p48 = por %p46, %p47
    %p50 = scmp.ne.s32.totalorder %s33, %s49
    %p51 = scmp.eq.s32.totalorder %s25, 0
    %p52 = por %p50, %p51
    %s53 = ssub.s32 %s19, %s26
    %p54 = scmp.eq.s32.totalorder %s53, 0
    %s56 = sadd.s32 %s55, 1
    %s57 = scalar_select %p54, %s55, %s56
    %p60 = pneg %p54
    %p61 = scmp.eq.s32.totalorder %s19, 1
    %p62 = por %p60, %p61
    %p63 = scmp.ne.s32.totalorder %s55, %s58
    %p64 = scmp.eq.s32.totalorder %s19, 0
    %p65 = por %p63, %p64
    %p66 = scmp.ne.s32.totalorder %s55, %s58
    %p67 = scmp.eq.s32.totalorder %s24, 1
    %p68 = por %p66, %p67
    %p69 = scmp.ne.s32.totalorder %s58, %s59
    %p70 = scmp.eq.s32.totalorder %s24, 0
    %p71 = por %p69, %p70
    %p72 = scmp.ne.s32.totalorder %s58, %s59
    %p73 = scmp.eq.s32.totalorder %s25, 1
    %p74 = por %p72, %p73
    %p76 = scmp.ne.s32.totalorder %s59, %s75
    %p77 = scmp.eq.s32.totalorder %s25, 0
    %p78 = por %p76, %p77
    %s79 = ssub.s32 %s19, %s26
    %p80 = scmp.eq.s32.totalorder %s79, 0
    %s82 = sadd.s32 %s81, 1
    %s83 = scalar_select %p80, %s81, %s82
    %p86 = pneg %p80
    %p87 = scmp.eq.s32.totalorder %s19, 1
    %p88 = por %p86, %p87
    %p89 = scmp.ne.s32.totalorder %s81, %s84
    %p90 = scmp.eq.s32.totalorder %s19, 0
    %p91 = por %p89, %p90
    %p92 = scmp.ne.s32.totalorder %s81, %s84
    %p93 = scmp.eq.s32.totalorder %s24, 1
    %p94 = por %p92, %p93
    %p95 = scmp.ne.s32.totalorder %s84, %s85
    %p96 = scmp.eq.s32.totalorder %s24, 0
    %p97 = por %p95, %p96
    %p98 = scmp.ne.s32.totalorder %s84, %s85
    %p99 = scmp.eq.s32.totalorder %s25, 1
    %p100 = por %p98, %p99
    %p102 = scmp.ne.s32.totalorder %s85, %s101
    %p103 = scmp.eq.s32.totalorder %s25, 0
    %p104 = por %p102, %p103
    %s106 = sadd.s32 %s105, 1
    %p109 = scmp.eq.s32.totalorder %s19, 1
    %p110 = scmp.ne.s32.totalorder %s105, %s107
    %p111 = scmp.eq.s32.totalorder %s19, 0
    %p112 = por %p110, %p111
    %p113 = scmp.ne.s32.totalorder %s105, %s107
    %p114 = scmp.eq.s32.totalorder %s24, 1
    %p115 = por %p113, %p114
    %p116 = scmp.ne.s32.totalorder %s107, %s108
    %p117 = scmp.eq.s32.totalorder %s24, 0
    %p118 = por %p116, %p117
    %p119 = scmp.ne.s32.totalorder %s107, %s108
    %p120 = scmp.eq.s32.totalorder %s25, 1
    %p121 = por %p119, %p120
    %p123 = scmp.ne.s32.totalorder %s108, %s122
    %p124 = scmp.eq.s32.totalorder %s25, 0
    %p125 = por %p123, %p124
    %s127 = sadd.s32 %s126, 1
    %p130 = scmp.eq.s32.totalorder %s19, 1
    %p131 = scmp.ne.s32.totalorder %s126, %s128
    %p132 = scmp.eq.s32.totalorder %s19, 0
    %p133 = por %p131, %p132
    %p134 = scmp.ne.s32.totalorder %s126, %s128
    %p135 = scmp.eq.s32.totalorder %s24, 1
    %p136 = por %p134, %p135
    %p137 = scmp.ne.s32.totalorder %s128, %s129
    %p138 = scmp.eq.s32.totalorder %s24, 0
    %p139 = por %p137, %p138
    %p140 = scmp.ne.s32.totalorder %s128, %s129
    %p141 = scmp.eq.s32.totalorder %s25, 1
    %p142 = por %p140, %p141
    %p144 = scmp.ne.s32.totalorder %s129, %s143
    %p145 = scmp.eq.s32.totalorder %s25, 0
    %p146 = por %p144, %p145
    %s148 = sadd.s32 %s147, 1
    %p151 = scmp.eq.s32.totalorder %s19, 1
    %p152 = scmp.ne.s32.totalorder %s147, %s149
    %p153 = scmp.eq.s32.totalorder %s19, 0
    %p154 = por %p152, %p153
    %p155 = scmp.ne.s32.totalorder %s147, %s149
    %p156 = scmp.eq.s32.totalorder %s24, 1
    %p157 = por %p155, %p156
    %p158 = scmp.ne.s32.totalorder %s149, %s150
    %p159 = scmp.eq.s32.totalorder %s24, 0
    %p160 = por %p158, %p159
    %p161 = scmp.ne.s32.totalorder %s149, %s150
    %p162 = scmp.eq.s32.totalorder %s25, 1
    %p163 = por %p161, %p162
    %p165 = scmp.ne.s32.totalorder %s150, %s164
    %p166 = scmp.eq.s32.totalorder %s25, 0
    %p167 = por %p165, %p166
    %s169 = sadd.s32 %s168, 1
    %p172 = scmp.eq.s32.totalorder %s19, 1
    %p173 = scmp.ne.s32.totalorder %s168, %s170
    %p174 = scmp.eq.s32.totalorder %s19, 0
    %p175 = por %p173, %p174
    %p176 = scmp.ne.s32.totalorder %s168, %s170
    %p177 = scmp.eq.s32.totalorder %s24, 1
    %p178 = por %p176, %p177
    %p179 = scmp.ne.s32.totalorder %s170, %s171
    %p180 = scmp.eq.s32.totalorder %s24, 0
    %p181 = por %p179, %p180
    %p182 = scmp.ne.s32.totalorder %s170, %s171
    %p183 = scmp.eq.s32.totalorder %s25, 1
    %p184 = por %p182, %p183
    %p186 = scmp.ne.s32.totalorder %s171, %s185
    %p187 = scmp.eq.s32.totalorder %s25, 0
    %p188 = por %p186, %p187
    %s190 = sadd.s32 %s189, 1
    %p193 = scmp.eq.s32.totalorder %s19, 1
    %p194 = scmp.ne.s32.totalorder %s189, %s191
    %p195 = scmp.eq.s32.totalorder %s19, 0
    %p196 = por %p194, %p195
    %p197 = scmp.ne.s32.totalorder %s189, %s191
    %p198 = scmp.eq.s32.totalorder %s24, 1
    %p199 = por %p197, %p198
    %p200 = scmp.ne.s32.totalorder %s191, %s192
    %p201 = scmp.eq.s32.totalorder %s24, 0
    %p202 = por %p200, %p201
    %p203 = scmp.ne.s32.totalorder %s191, %s192
    %p204 = scmp.eq.s32.totalorder %s25, 1
    %p205 = por %p203, %p204
    %p207 = scmp.ne.s32.totalorder %s192, %s206
    %p208 = scmp.eq.s32.totalorder %s25, 0
    %p209 = por %p207, %p208
    %s211 = sadd.s32 %s210, 1
    %p214 = scmp.eq.s32.totalorder %s19, 1
    %p215 = scmp.ne.s32.totalorder %s210, %s212
    %p216 = scmp.eq.s32.totalorder %s19, 0
    %p217 = por %p215, %p216
    %p218 = scmp.ne.s32.totalorder %s210, %s212
    %p219 = scmp.eq.s32.totalorder %s24, 1
    %p220 = por %p218, %p219
    %p221 = scmp.ne.s32.totalorder %s212, %s213
    %p222 = scmp.eq.s32.totalorder %s24, 0
    %p223 = por %p221, %p222
    %p224 = scmp.ne.s32.totalorder %s212, %s213
    %p225 = scmp.eq.s32.totalorder %s25, 1
    %p226 = por %p224, %p225
    %p228 = scmp.ne.s32.totalorder %s213, %s227
    %p229 = scmp.eq.s32.totalorder %s25, 0
    %p230 = por %p228, %p229
    %s232 = sadd.s32 %s231, 1
    %p235 = scmp.eq.s32.totalorder %s19, 1
    %p236 = scmp.ne.s32.totalorder %s231, %s233
    %p237 = scmp.eq.s32.totalorder %s19, 0
    %p238 = por %p236, %p237
    %p239 = scmp.ne.s32.totalorder %s231, %s233
    %p240 = scmp.eq.s32.totalorder %s24, 1
    %p241 = por %p239, %p240
    %p242 = scmp.ne.s32.totalorder %s233, %s234
    %p243 = scmp.eq.s32.totalorder %s24, 0
    %p244 = por %p242, %p243
    %p245 = scmp.ne.s32.totalorder %s233, %s234
    %p246 = scmp.eq.s32.totalorder %s25, 1
    %p247 = por %p245, %p246
    %p249 = scmp.ne.s32.totalorder %s234, %s248
    %p250 = scmp.eq.s32.totalorder %s25, 0
    %p251 = por %p249, %p250
    %s253 = sadd.s32 %s252, 1
    %p256 = scmp.eq.s32.totalorder %s19, 1
    %p257 = scmp.ne.s32.totalorder %s252, %s254
    %p258 = scmp.eq.s32.totalorder %s19, 0
    %p259 = por %p257, %p258
    %p260 = scmp.ne.s32.totalorder %s252, %s254
    %p261 = scmp.eq.s32.totalorder %s24, 1
    %p262 = por %p260, %p261
    %p263 = scmp.ne.s32.totalorder %s254, %s255
    %p264 = scmp.eq.s32.totalorder %s24, 0
    %p265 = por %p263, %p264
    %p266 = scmp.ne.s32.totalorder %s254, %s255
    %p267 = scmp.eq.s32.totalorder %s25, 1
    %p268 = por %p266, %p267
    %p270 = scmp.ne.s32.totalorder %s255, %s269
    %p271 = scmp.eq.s32.totalorder %s25, 0
    %p272 = por %p270, %p271
    %s273 = ssub.s32 %s19, %s26
    %p274 = scmp.eq.s32.totalorder %s273, 0
    %s276 = sadd.s32 %s275, 1
    %s277 = scalar_select %p274, %s275, %s276
    %p280 = pneg %p274
    %p281 = scmp.eq.s32.totalorder %s19, 1
    %p282 = por %p280, %p281
    %p283 = scmp.ne.s32.totalorder %s275, %s278
    %p284 = scmp.eq.s32.totalorder %s19, 0
    %p285 = por %p283, %p284
    %p286 = scmp.ne.s32.totalorder %s275, %s278
    %p287 = scmp.eq.s32.totalorder %s24, 1
    %p288 = por %p286, %p287
    %p289 = scmp.ne.s32.totalorder %s278, %s279
    %p290 = scmp.eq.s32.totalorder %s24, 0
    %p291 = por %p289, %p290
    %p292 = scmp.ne.s32.totalorder %s278, %s279
    %p293 = scmp.eq.s32.totalorder %s25, 1
    %p294 = por %p292, %p293
    %p296 = scmp.ne.s32.totalorder %s279, %s295
    %p297 = scmp.eq.s32.totalorder %s25, 0
    %p298 = por %p296, %p297
    %p299 = scmp.le.s32.totalorder 1, %s19
    %p300 = scmp.lt.s32.totalorder %s19, 3
    %p301 = pnand %p299, %p300
    %p302 = pneg %p301
    // Predicated region
    $region9: #{widedeep_forward.1} parent=5 // pred_check
      _
    $region10: #{widedeep_forward.1} parent=5 // pred_check_branch
      %304 = sbr.rel (%p301) target = $region12
    $region11: #{widedeep_forward.1} parent=5 // pred_region
      %s305 = ssub.s32 %s19, 1
      // Predicated region
      $region13: #{widedeep_forward.1} parent=11 // pred_check
        %p306 = pneg %p118
      $region14: #{widedeep_forward.1} parent=11 // pred_check_branch
        %308 = sbr.rel (%p306) target = $region16
      $region15: #{widedeep_forward.1} parent=11 // pred_region
        _
      $region16: #{widedeep_forward.1} parent=11 // pred_fallthru
        _
      // Predicated region
      $region17: #{widedeep_forward.1} parent=11 // pred_check
        %p309 = pneg %p139
      $region18: #{widedeep_forward.1} parent=11 // pred_check_branch
        %311 = sbr.rel (%p309) target = $region20
      $region19: #{widedeep_forward.1} parent=11 // pred_region
        _
      $region20: #{widedeep_forward.1} parent=11 // pred_fallthru
        _
      // Predicated region
      $region21: #{widedeep_forward.1} parent=11 // pred_check
        %p312 = pneg %p160
      $region22: #{widedeep_forward.1} parent=11 // pred_check_branch
        %314 = sbr.rel (%p312) target = $region24
      $region23: #{widedeep_forward.1} parent=11 // pred_region
        _
      $region24: #{widedeep_forward.1} parent=11 // pred_fallthru
        _
      // Predicated region
      $region25: #{widedeep_forward.1} parent=11 // pred_check
        %p315 = pneg %p181
      $region26: #{widedeep_forward.1} parent=11 // pred_check_branch
        %317 = sbr.rel (%p315) target = $region28
      $region27: #{widedeep_forward.1} parent=11 // pred_region
        _
      $region28: #{widedeep_forward.1} parent=11 // pred_fallthru
        _
      // Predicated region
      $region29: #{widedeep_forward.1} parent=11 // pred_check
        %p318 = pneg %p202
      $region30: #{widedeep_forward.1} parent=11 // pred_check_branch
        %320 = sbr.rel (%p318) target = $region32
      $region31: #{widedeep_forward.1} parent=11 // pred_region
        _
      $region32: #{widedeep_forward.1} parent=11 // pred_fallthru
        _
      // Predicated region
      $region33: #{widedeep_forward.1} parent=11 // pred_check
        %p321 = pneg %p223
      $region34: #{widedeep_forward.1} parent=11 // pred_check_branch
        %323 = sbr.rel (%p321) target = $region36
      $region35: #{widedeep_forward.1} parent=11 // pred_region
        _
      $region36: #{widedeep_forward.1} parent=11 // pred_fallthru
        _
      // Predicated region
      $region37: #{widedeep_forward.1} parent=11 // pred_check
        %p324 = pneg %p244
      $region38: #{widedeep_forward.1} parent=11 // pred_check_branch
        %326 = sbr.rel (%p324) target = $region40
      $region39: #{widedeep_forward.1} parent=11 // pred_region
        _
      $region40: #{widedeep_forward.1} parent=11 // pred_fallthru
        _
      // Predicated region
      $region41: #{widedeep_forward.1} parent=11 // pred_check
        %p327 = pneg %p265
      $region42: #{widedeep_forward.1} parent=11 // pred_check_branch
        %329 = sbr.rel (%p327) target = $region44
      $region43: #{widedeep_forward.1} parent=11 // pred_region
        _
      $region44: #{widedeep_forward.1} parent=11 // pred_fallthru
        _
    $region12: #{widedeep_forward.1} parent=5 // pred_fallthru
      _
    %p330 = scmp.lt.s32.totalorder %s19, 2
    // Predicated region
    $region45: #{widedeep_forward.1} parent=5 // pred_check
      %p331 = pneg %p330
    $region46: #{widedeep_forward.1} parent=5 // pred_check_branch
      %333 = sbr.rel (%p331) target = $region48
    $region47: #{widedeep_forward.1} parent=5 // pred_region
      // Predicated region
      $region49: #{widedeep_forward.1} parent=47 // pred_check
        %p334 = pneg %p39
      $region50: #{widedeep_forward.1} parent=47 // pred_check_branch
        %336 = sbr.rel (%p334) target = $region52
      $region51: #{widedeep_forward.1} parent=47 // pred_region
        %s337 = smul.u32 16, %s19
        %p338 = scmp.lt.s32.totalorder %s337, 31
        %s339 = scalar_select %p338, %s337, 31
        %s340 = smul.addr %s339, 8
        %s341 = scalar_lea.vmem %s0, %s340
        %s342 = smul.u32 16, %s19
      $region52: #{widedeep_forward.1} parent=47 // pred_fallthru
        _
      // Predicated region
      $region53: #{widedeep_forward.1} parent=47 // pred_check
        %p343 = pneg %p65
      $region54: #{widedeep_forward.1} parent=47 // pred_check_branch
        %345 = sbr.rel (%p343) target = $region56
      $region55: #{widedeep_forward.1} parent=47 // pred_region
        %s346 = smul.u32 16, %s19
        %p347 = scmp.lt.s32.totalorder %s346, 31
        %s348 = scalar_select %p347, %s346, 31
        %s349 = smul.addr %s348, 4
        %s350 = scalar_lea.vmem %s1, %s349
        %s351 = smul.u32 16, %s19
      $region56: #{widedeep_forward.1} parent=47 // pred_fallthru
        _
      // Predicated region
      $region57: #{widedeep_forward.1} parent=47 // pred_check
        %p352 = pneg %p91
      $region58: #{widedeep_forward.1} parent=47 // pred_check_branch
        %354 = sbr.rel (%p352) target = $region60
      $region59: #{widedeep_forward.1} parent=47 // pred_region
        %s355 = smul.u32 16, %s19
        %p356 = scmp.lt.s32.totalorder %s355, 31
        %s357 = scalar_select %p356, %s355, 31
        %s358 = smul.addr %s357, 8
        %s359 = scalar_lea.vmem %s2, %s358
        %s360 = smul.u32 16, %s19
      $region60: #{widedeep_forward.1} parent=47 // pred_fallthru
        _
    $region48: #{widedeep_forward.1} parent=5 // pred_fallthru
      _
    %p361 = scmp.le.s32.totalorder 1, %s19
    %p362 = scmp.lt.s32.totalorder %s19, 3
    %p363 = pnand %p361, %p362
    %p364 = pneg %p363
    // Predicated region
    $region61: #{widedeep_forward.1} parent=5 // pred_check
      _
    $region62: #{widedeep_forward.1} parent=5 // pred_check_branch
      %366 = sbr.rel (%p363) target = $region64
    $region63: #{widedeep_forward.1} parent=5 // pred_region
      %s367 = ssub.s32 %s19, 1
      %s368 = smul.u32 16, %s24
      %p369 = scmp.lt.s32.totalorder %s368, 31
      %s370 = scalar_select %p369, %s368, 31
      %s371 = smul.addr %s370, 8
      %s372 = scalar_lea.vmem %s0, %s371
      %p373 = pneg %p45
      %p374 = pneg %p42
      %s375 = smul.u32 16, %s24
      %p376 = scmp.lt.s32.totalorder %s375, 31
      %s377 = scalar_select %p376, %s375, 31
      %s378 = smul.addr %s377, 4
      %s379 = scalar_lea.vmem %s1, %s378
      %p380 = pneg %p71
      %p381 = pneg %p68
      %s382 = smul.u32 16, %s24
      %p383 = scmp.lt.s32.totalorder %s382, 31
      %s384 = scalar_select %p383, %s382, 31
      %s385 = smul.addr %s384, 8
      %s386 = scalar_lea.vmem %s2, %s385
      %p387 = pneg %p97
      %p388 = pneg %p94
      %p389 = pneg %p118
      %p390 = pneg %p115
      %p391 = pneg %p139
      %p392 = pneg %p136
      %p393 = pneg %p160
      %p394 = pneg %p157
      %p395 = pneg %p181
      %p396 = pneg %p178
      %p397 = pneg %p202
      %p398 = pneg %p199
      %p399 = pneg %p223
      %p400 = pneg %p220
      %p401 = pneg %p244
      %p402 = pneg %p241
      %p403 = pneg %p265
      %p404 = pneg %p262
      %p405 = pneg %p291
      %p406 = pneg %p288
      %s407 = smul.u32 16, %s24
      %p408 = scmp.lt.s32.totalorder %s407, 31
      %s409 = scalar_select %p408, %s407, 31
      %s410 = smul.addr %s409, 8
      %s411 = scalar_lea.vmem %s11, %s410
      %s412 = smul.u32 16, %s24
      %p413 = scmp.lt.s32.totalorder %s412, 31
      %s414 = scalar_select %p413, %s412, 31
      %s415 = smul.addr %s414, 8
      %s416 = scalar_lea.vmem %s0, %s415
      %s417 = smul.u32 16, %s24
      %s418 = smul.u32 16, %s24
      %p419 = scmp.lt.s32.totalorder %s418, 31
      %s420 = scalar_select %p419, %s418, 31
      %s421 = smul.addr %s420, 4
      %s422 = scalar_lea.vmem %s1, %s421
      %s423 = smul.u32 16, %s24
      %s424 = smul.u32 16, %s24
      %p425 = scmp.lt.s32.totalorder %s424, 31
      %s426 = scalar_select %p425, %s424, 31
      %s427 = smul.addr %s426, 8
      %s428 = scalar_lea.vmem %s2, %s427
      %s429 = smul.u32 16, %s24
      %s430 = smul.u32 16, %s24
      %p431 = scmp.lt.s32.totalorder %s430, 31
      %s432 = scalar_select %p431, %s430, 31
      %s433 = smul.addr %s432, 8
      %s434 = scalar_lea.vmem %s11, %s433
      %s435 = smul.u32 16, %s24
      %v437 = vld [vmem:[%s428] sm:$0xff]
      %v438 = vld [vmem:[%s428 + $0x8] sm:$0xff]
      %v439 = vld [vmem:[%s428 + $0x10] sm:$0xff]
      %v440 = vld [vmem:[%s428 + $0x18] sm:$0xff]
      %v441 = vld [vmem:[%s428 + $0x20] sm:$0xff]
      %v442 = vld [vmem:[%s428 + $0x28] sm:$0xff]
      %v443 = vld [vmem:[%s428 + $0x30] sm:$0xff]
      %v444 = vld [vmem:[%s428 + $0x38] sm:$0xff]
      %v445 = vld [vmem:[%s428 + $0x40] sm:$0xff]
      %v446 = vld [vmem:[%s428 + $0x48] sm:$0xff]
      %v447 = vld [vmem:[%s428 + $0x50] sm:$0xff]
      %v448 = vld [vmem:[%s428 + $0x58] sm:$0xff]
      %v449 = vld [vmem:[%s428 + $0x60] sm:$0xff]
      %v450 = vld [vmem:[%s428 + $0x68] sm:$0xff]
      %v451 = vld [vmem:[%s428 + $0x70] sm:$0xff]
      %v452 = vld [vmem:[%s428 + $0x78] sm:$0xff]
      %v453 = vlaneseq
      %v454 = vand.u32 %v453, 127
      %455 = vset.pattern.permute.xlu0 0
      %456 = vperm.xlu0 %455, %v437
      %v457 = vpop.permute.xlu0 %456
      %458 = vset.pattern.permute.xlu0 0
      %459 = vperm.xlu0 %458, %v438
      %v460 = vpop.permute.xlu0 %459
      %461 = vset.pattern.permute.xlu0 0
      %462 = vperm.xlu0 %461, %v439
      %v463 = vpop.permute.xlu0 %462
      %464 = vset.pattern.permute.xlu0 0
      %465 = vperm.xlu0 %464, %v440
      %v466 = vpop.permute.xlu0 %465
      %467 = vset.pattern.permute.xlu0 0
      %468 = vperm.xlu0 %467, %v441
      %v469 = vpop.permute.xlu0 %468
      %470 = vset.pattern.permute.xlu0 0
      %471 = vperm.xlu0 %470, %v442
      %v472 = vpop.permute.xlu0 %471
      %473 = vset.pattern.permute.xlu0 0
      %474 = vperm.xlu0 %473, %v443
      %v475 = vpop.permute.xlu0 %474
      %476 = vset.pattern.permute.xlu0 0
      %477 = vperm.xlu0 %476, %v444
      %v478 = vpop.permute.xlu0 %477
      %479 = vset.pattern.permute.xlu0 0
      %480 = vperm.xlu0 %479, %v445
      %v481 = vpop.permute.xlu0 %480
      %482 = vset.pattern.permute.xlu0 0
      %483 = vperm.xlu0 %482, %v446
      %v484 = vpop.permute.xlu0 %483
      %485 = vset.pattern.permute.xlu0 0
      %486 = vperm.xlu0 %485, %v447
      %v487 = vpop.permute.xlu0 %486
      %488 = vset.pattern.permute.xlu0 0
      %489 = vperm.xlu0 %488, %v448
      %v490 = vpop.permute.xlu0 %489
      %491 = vset.pattern.permute.xlu0 0
      %492 = vperm.xlu0 %491, %v449
      %v493 = vpop.permute.xlu0 %492
      %494 = vset.pattern.permute.xlu0 0
      %495 = vperm.xlu0 %494, %v450
      %v496 = vpop.permute.xlu0 %495
      %497 = vset.pattern.permute.xlu0 0
      %498 = vperm.xlu0 %497, %v451
      %v499 = vpop.permute.xlu0 %498
      %500 = vset.pattern.permute.xlu0 0
      %501 = vperm.xlu0 %500, %v452
      %v502 = vpop.permute.xlu0 %501
      %vm503 = vcmp.eq.s32.totalorder %v454, %v457
      %vm504 = vcmp.eq.s32.totalorder %v454, %v460
      %vm505 = vcmp.eq.s32.totalorder %v454, %v463
      %vm506 = vcmp.eq.s32.totalorder %v454, %v466
      %vm507 = vcmp.eq.s32.totalorder %v454, %v469
      %vm508 = vcmp.eq.s32.totalorder %v454, %v472
      %vm509 = vcmp.eq.s32.totalorder %v454, %v475
      %vm510 = vcmp.eq.s32.totalorder %v454, %v478
      %vm511 = vcmp.eq.s32.totalorder %v454, %v481
      %vm512 = vcmp.eq.s32.totalorder %v454, %v484
      %vm513 = vcmp.eq.s32.totalorder %v454, %v487
      %vm514 = vcmp.eq.s32.totalorder %v454, %v490
      %vm515 = vcmp.eq.s32.totalorder %v454, %v493
      %vm516 = vcmp.eq.s32.totalorder %v454, %v496
      %vm517 = vcmp.eq.s32.totalorder %v454, %v499
      %vm518 = vcmp.eq.s32.totalorder %v454, %v502
      %v519 = vsel %vm503, 1, 0
      %v520 = vsel %vm504, 1, 0
      %v521 = vsel %vm505, 1, 0
      %v522 = vsel %vm506, 1, 0
      %v523 = vsel %vm507, 1, 0
      %v524 = vsel %vm508, 1, 0
      %v525 = vsel %vm509, 1, 0
      %v526 = vsel %vm510, 1, 0
      %v527 = vsel %vm511, 1, 0
      %v528 = vsel %vm512, 1, 0
      %v529 = vsel %vm513, 1, 0
      %v530 = vsel %vm514, 1, 0
      %v531 = vsel %vm515, 1, 0
      %v532 = vsel %vm516, 1, 0
      %v533 = vsel %vm517, 1, 0
      %v534 = vsel %vm518, 1, 0
      %v535 = vcvt.s32.f32 %v519
      %v536 = vcvt.s32.f32 %v520
      %v537 = vcvt.s32.f32 %v521
      %v538 = vcvt.s32.f32 %v522
      %v539 = vcvt.s32.f32 %v523
      %v540 = vcvt.s32.f32 %v524
      %v541 = vcvt.s32.f32 %v525
      %v542 = vcvt.s32.f32 %v526
      %v543 = vcvt.s32.f32 %v527
      %v544 = vcvt.s32.f32 %v528
      %v545 = vcvt.s32.f32 %v529
      %v546 = vcvt.s32.f32 %v530
      %v547 = vcvt.s32.f32 %v531
      %v548 = vcvt.s32.f32 %v532
      %v549 = vcvt.s32.f32 %v533
      %v550 = vcvt.s32.f32 %v534
      %v551 = vadd.f32 %v535, 0.0
      %v552 = vadd.f32 %v536, 0.0
      %v553 = vadd.f32 %v537, 0.0
      %v554 = vadd.f32 %v538, 0.0
      %v555 = vadd.f32 %v539, 0.0
      %v556 = vadd.f32 %v540, 0.0
      %v557 = vadd.f32 %v541, 0.0
      %v558 = vadd.f32 %v542, 0.0
      %v559 = vadd.f32 %v543, 0.0
      %v560 = vadd.f32 %v544, 0.0
      %v561 = vadd.f32 %v545, 0.0
      %v562 = vadd.f32 %v546, 0.0
      %v563 = vadd.f32 %v547, 0.0
      %v564 = vadd.f32 %v548, 0.0
      %v565 = vadd.f32 %v549, 0.0
      %v566 = vadd.f32 %v550, 0.0
      %567 = vset.pattern.permute.xlu0 1
      %568 = vperm.xlu0 %567, %v437
      %v569 = vpop.permute.xlu0 %568
      %570 = vset.pattern.permute.xlu0 1
      %571 = vperm.xlu0 %570, %v438
      %v572 = vpop.permute.xlu0 %571
      %573 = vset.pattern.permute.xlu0 1
      %574 = vperm.xlu0 %573, %v439
      %v575 = vpop.permute.xlu0 %574
      %576 = vset.pattern.permute.xlu0 1
      %577 = vperm.xlu0 %576, %v440
      %v578 = vpop.permute.xlu0 %577
      %579 = vset.pattern.permute.xlu0 1
      %580 = vperm.xlu0 %579, %v441
      %v581 = vpop.permute.xlu0 %580
      %582 = vset.pattern.permute.xlu0 1
      %583 = vperm.xlu0 %582, %v442
      %v584 = vpop.permute.xlu0 %583
      %585 = vset.pattern.permute.xlu0 1
      %586 = vperm.xlu0 %585, %v443
      %v587 = vpop.permute.xlu0 %586
      %588 = vset.pattern.permute.xlu0 1
      %589 = vperm.xlu0 %588, %v444
      %v590 = vpop.permute.xlu0 %589
      %591 = vset.pattern.permute.xlu0 1
      %592 = vperm.xlu0 %591, %v445
      %v593 = vpop.permute.xlu0 %592
      %594 = vset.pattern.permute.xlu0 1
      %595 = vperm.xlu0 %594, %v446
      %v596 = vpop.permute.xlu0 %595
      %597 = vset.pattern.permute.xlu0 1
      %598 = vperm.xlu0 %597, %v447
      %v599 = vpop.permute.xlu0 %598
      %600 = vset.pattern.permute.xlu0 1
      %601 = vperm.xlu0 %600, %v448
      %v602 = vpop.permute.xlu0 %601
      %603 = vset.pattern.permute.xlu0 1
      %604 = vperm.xlu0 %603, %v449
      %v605 = vpop.permute.xlu0 %604
      %606 = vset.pattern.permute.xlu0 1
      %607 = vperm.xlu0 %606, %v450
      %v608 = vpop.permute.xlu0 %607
      %609 = vset.pattern.permute.xlu0 1
      %610 = vperm.xlu0 %609, %v451
      %v611 = vpop.permute.xlu0 %610
      %612 = vset.pattern.permute.xlu0 1
      %613 = vperm.xlu0 %612, %v452
      %v614 = vpop.permute.xlu0 %613
      %vm615 = vcmp.eq.s32.totalorder %v454, %v569
      %vm616 = vcmp.eq.s32.totalorder %v454, %v572
      %vm617 = vcmp.eq.s32.totalorder %v454, %v575
      %vm618 = vcmp.eq.s32.totalorder %v454, %v578
      %vm619 = vcmp.eq.s32.totalorder %v454, %v581
      %vm620 = vcmp.eq.s32.totalorder %v454, %v584
      %vm621 = vcmp.eq.s32.totalorder %v454, %v587
      %vm622 = vcmp.eq.s32.totalorder %v454, %v590
      %vm623 = vcmp.eq.s32.totalorder %v454, %v593
      %vm624 = vcmp.eq.s32.totalorder %v454, %v596
      %vm625 = vcmp.eq.s32.totalorder %v454, %v599
      %vm626 = vcmp.eq.s32.totalorder %v454, %v602
      %vm627 = vcmp.eq.s32.totalorder %v454, %v605
      %vm628 = vcmp.eq.s32.totalorder %v454, %v608
      %vm629 = vcmp.eq.s32.totalorder %v454, %v611
      %vm630 = vcmp.eq.s32.totalorder %v454, %v614
      %v631 = vsel %vm615, 1, 0
      %v632 = vsel %vm616, 1, 0
      %v633 = vsel %vm617, 1, 0
      %v634 = vsel %vm618, 1, 0
      %v635 = vsel %vm619, 1, 0
      %v636 = vsel %vm620, 1, 0
      %v637 = vsel %vm621, 1, 0
      %v638 = vsel %vm622, 1, 0
      %v639 = vsel %vm623, 1, 0
      %v640 = vsel %vm624, 1, 0
      %v641 = vsel %vm625, 1, 0
      %v642 = vsel %vm626, 1, 0
      %v643 = vsel %vm627, 1, 0
      %v644 = vsel %vm628, 1, 0
      %v645 = vsel %vm629, 1, 0
      %v646 = vsel %vm630, 1, 0
      %v647 = vcvt.s32.f32 %v631
      %v648 = vcvt.s32.f32 %v632
      %v649 = vcvt.s32.f32 %v633
      %v650 = vcvt.s32.f32 %v634
      %v651 = vcvt.s32.f32 %v635
      %v652 = vcvt.s32.f32 %v636
      %v653 = vcvt.s32.f32 %v637
      %v654 = vcvt.s32.f32 %v638
      %v655 = vcvt.s32.f32 %v639
      %v656 = vcvt.s32.f32 %v640
      %v657 = vcvt.s32.f32 %v641
      %v658 = vcvt.s32.f32 %v642
      %v659 = vcvt.s32.f32 %v643
      %v660 = vcvt.s32.f32 %v644
      %v661 = vcvt.s32.f32 %v645
      %v662 = vcvt.s32.f32 %v646
      %v663 = vadd.f32 %v551, %v647
      %v664 = vadd.f32 %v552, %v648
      %v665 = vadd.f32 %v553, %v649
      %v666 = vadd.f32 %v554, %v650
      %v667 = vadd.f32 %v555, %v651
      %v668 = vadd.f32 %v556, %v652
      %v669 = vadd.f32 %v557, %v653
      %v670 = vadd.f32 %v558, %v654
      %v671 = vadd.f32 %v559, %v655
      %v672 = vadd.f32 %v560, %v656
      %v673 = vadd.f32 %v561, %v657
      %v674 = vadd.f32 %v562, %v658
      %v675 = vadd.f32 %v563, %v659
      %v676 = vadd.f32 %v564, %v660
      %v677 = vadd.f32 %v565, %v661
      %v678 = vadd.f32 %v566, %v662
      %679 = vset.pattern.permute.xlu0 2
      %680 = vperm.xlu0 %679, %v437
      %v681 = vpop.permute.xlu0 %680
      %682 = vset.pattern.permute.xlu0 2
      %683 = vperm.xlu0 %682, %v438
      %v684 = vpop.permute.xlu0 %683
      %685 = vset.pattern.permute.xlu0 2
      %686 = vperm.xlu0 %685, %v439
      %v687 = vpop.permute.xlu0 %686
      %688 = vset.pattern.permute.xlu0 2
      %689 = vperm.xlu0 %688, %v440
      %v690 = vpop.permute.xlu0 %689
      %691 = vset.pattern.permute.xlu0 2
      %692 = vperm.xlu0 %691, %v441
      %v693 = vpop.permute.xlu0 %692
      %694 = vset.pattern.permute.xlu0 2
      %695 = vperm.xlu0 %694, %v442
      %v696 = vpop.permute.xlu0 %695
      %697 = vset.pattern.permute.xlu0 2
      %698 = vperm.xlu0 %697, %v443
      %v699 = vpop.permute.xlu0 %698
      %700 = vset.pattern.permute.xlu0 2
      %701 = vperm.xlu0 %700, %v444
      %v702 = vpop.permute.xlu0 %701
      %703 = vset.pattern.permute.xlu0 2
      %704 = vperm.xlu0 %703, %v445
      %v705 = vpop.permute.xlu0 %704
      %706 = vset.pattern.permute.xlu0 2
      %707 = vperm.xlu0 %706, %v446
      %v708 = vpop.permute.xlu0 %707
      %709 = vset.pattern.permute.xlu0 2
      %710 = vperm.xlu0 %709, %v447
      %v711 = vpop.permute.xlu0 %710
      %712 = vset.pattern.permute.xlu0 2
      %713 = vperm.xlu0 %712, %v448
      %v714 = vpop.permute.xlu0 %713
      %715 = vset.pattern.permute.xlu0 2
      %716 = vperm.xlu0 %715, %v449
      %v717 = vpop.permute.xlu0 %716
      %718 = vset.pattern.permute.xlu0 2
      %719 = vperm.xlu0 %718, %v450
      %v720 = vpop.permute.xlu0 %719
      %721 = vset.pattern.permute.xlu0 2
      %722 = vperm.xlu0 %721, %v451
      %v723 = vpop.permute.xlu0 %722
      %724 = vset.pattern.permute.xlu0 2
      %725 = vperm.xlu0 %724, %v452
      %v726 = vpop.permute.xlu0 %725
      %vm727 = vcmp.eq.s32.totalorder %v454, %v681
      %vm728 = vcmp.eq.s32.totalorder %v454, %v684
      %vm729 = vcmp.eq.s32.totalorder %v454, %v687
      %vm730 = vcmp.eq.s32.totalorder %v454, %v690
      %vm731 = vcmp.eq.s32.totalorder %v454, %v693
      %vm732 = vcmp.eq.s32.totalorder %v454, %v696
      %vm733 = vcmp.eq.s32.totalorder %v454, %v699
      %vm734 = vcmp.eq.s32.totalorder %v454, %v702
      %vm735 = vcmp.eq.s32.totalorder %v454, %v705
      %vm736 = vcmp.eq.s32.totalorder %v454, %v708
      %vm737 = vcmp.eq.s32.totalorder %v454, %v711
      %vm738 = vcmp.eq.s32.totalorder %v454, %v714
      %vm739 = vcmp.eq.s32.totalorder %v454, %v717
      %vm740 = vcmp.eq.s32.totalorder %v454, %v720
      %vm741 = vcmp.eq.s32.totalorder %v454, %v723
      %vm742 = vcmp.eq.s32.totalorder %v454, %v726
      %v743 = vsel %vm727, 1, 0
      %v744 = vsel %vm728, 1, 0
      %v745 = vsel %vm729, 1, 0
      %v746 = vsel %vm730, 1, 0
      %v747 = vsel %vm731, 1, 0
      %v748 = vsel %vm732, 1, 0
      %v749 = vsel %vm733, 1, 0
      %v750 = vsel %vm734, 1, 0
      %v751 = vsel %vm735, 1, 0
      %v752 = vsel %vm736, 1, 0
      %v753 = vsel %vm737, 1, 0
      %v754 = vsel %vm738, 1, 0
      %v755 = vsel %vm739, 1, 0
      %v756 = vsel %vm740, 1, 0
      %v757 = vsel %vm741, 1, 0
      %v758 = vsel %vm742, 1, 0
      %v759 = vcvt.s32.f32 %v743
      %v760 = vcvt.s32.f32 %v744
      %v761 = vcvt.s32.f32 %v745
      %v762 = vcvt.s32.f32 %v746
      %v763 = vcvt.s32.f32 %v747
      %v764 = vcvt.s32.f32 %v748
      %v765 = vcvt.s32.f32 %v749
      %v766 = vcvt.s32.f32 %v750
      %v767 = vcvt.s32.f32 %v751
      %v768 = vcvt.s32.f32 %v752
      %v769 = vcvt.s32.f32 %v753
      %v770 = vcvt.s32.f32 %v754
      %v771 = vcvt.s32.f32 %v755
      %v772 = vcvt.s32.f32 %v756
      %v773 = vcvt.s32.f32 %v757
      %v774 = vcvt.s32.f32 %v758
      %v775 = vadd.f32 %v663, %v759
      %v776 = vadd.f32 %v664, %v760
      %v777 = vadd.f32 %v665, %v761
      %v778 = vadd.f32 %v666, %v762
      %v779 = vadd.f32 %v667, %v763
      %v780 = vadd.f32 %v668, %v764
      %v781 = vadd.f32 %v669, %v765
      %v782 = vadd.f32 %v670, %v766
      %v783 = vadd.f32 %v671, %v767
      %v784 = vadd.f32 %v672, %v768
      %v785 = vadd.f32 %v673, %v769
      %v786 = vadd.f32 %v674, %v770
      %v787 = vadd.f32 %v675, %v771
      %v788 = vadd.f32 %v676, %v772
      %v789 = vadd.f32 %v677, %v773
      %v790 = vadd.f32 %v678, %v774
      %v791 = vld [vmem:[%s422] sm:$0xf]
      %v792 = vld [vmem:[%s422 + $0x4] sm:$0xf]
      %v793 = vld [vmem:[%s422 + $0x8] sm:$0xf]
      %v794 = vld [vmem:[%s422 + $0xc] sm:$0xf]
      %v795 = vld [vmem:[%s422 + $0x10] sm:$0xf]
      %v796 = vld [vmem:[%s422 + $0x14] sm:$0xf]
      %v797 = vld [vmem:[%s422 + $0x18] sm:$0xf]
      %v798 = vld [vmem:[%s422 + $0x1c] sm:$0xf]
      %v799 = vld [vmem:[%s422 + $0x20] sm:$0xf]
      %v800 = vld [vmem:[%s422 + $0x24] sm:$0xf]
      %v801 = vld [vmem:[%s422 + $0x28] sm:$0xf]
      %v802 = vld [vmem:[%s422 + $0x2c] sm:$0xf]
      %v803 = vld [vmem:[%s422 + $0x30] sm:$0xf]
      %v804 = vld [vmem:[%s422 + $0x34] sm:$0xf]
      %v805 = vld [vmem:[%s422 + $0x38] sm:$0xf]
      %v806 = vld [vmem:[%s422 + $0x3c] sm:$0xf]
      %v807 = vld [vmem:[%s3] sm:$0xf]
      %v808 = vpack.c.bf16 %v776, %v775
      %v809 = vpack.c.bf16 %v778, %v777
      %v810 = vpack.c.bf16 %v780, %v779
      %v811 = vpack.c.bf16 %v782, %v781
      %v812 = vpack.c.bf16 %v784, %v783
      %v813 = vpack.c.bf16 %v786, %v785
      %v814 = vpack.c.bf16 %v788, %v787
      %v815 = vpack.c.bf16 %v790, %v789
      %v816 = vld [vmem:[%s4] sm:$0xf]
      %v817 = vld [vmem:[%s4 + $0x4] sm:$0xf]
      %v818 = vld [vmem:[%s4 + $0x8] sm:$0xf]
      %v819 = vld [vmem:[%s4 + $0xc] sm:$0xf]
      %v820 = vld [vmem:[%s4 + $0x10] sm:$0xf]
      %v821 = vld [vmem:[%s4 + $0x14] sm:$0xf]
      %v822 = vld [vmem:[%s4 + $0x18] sm:$0xf]
      %v823 = vld [vmem:[%s4 + $0x1c] sm:$0xf]
      %v824 = vld [vmem:[%s4 + $0x20] sm:$0xf]
      %v825 = vld [vmem:[%s4 + $0x24] sm:$0xf]
      %v826 = vld [vmem:[%s4 + $0x28] sm:$0xf]
      %v827 = vld [vmem:[%s4 + $0x2c] sm:$0xf]
      %v828 = vld [vmem:[%s4 + $0x30] sm:$0xf]
      %v829 = vld [vmem:[%s4 + $0x34] sm:$0xf]
      %v830 = vld [vmem:[%s4 + $0x38] sm:$0xf]
      %v831 = vld [vmem:[%s4 + $0x3c] sm:$0xf]
      %v848 = vunpack.c.l.b16 %v816
      %v849 = vunpack.c.l.b16 %v817
      %v850 = vunpack.c.l.b16 %v818
      %v851 = vunpack.c.l.b16 %v819
      %v852 = vunpack.c.l.b16 %v820
      %v853 = vunpack.c.l.b16 %v821
      %v854 = vunpack.c.l.b16 %v822
      %v855 = vunpack.c.l.b16 %v823
      %v856 = vunpack.c.l.b16 %v824
      %v857 = vunpack.c.l.b16 %v825
      %v858 = vunpack.c.l.b16 %v826
      %v859 = vunpack.c.l.b16 %v827
      %v860 = vunpack.c.l.b16 %v828
      %v861 = vunpack.c.l.b16 %v829
      %v862 = vunpack.c.l.b16 %v830
      %v863 = vunpack.c.l.b16 %v831
      %v864 = vpack.c.b16 %v849, %v848
      %v865 = vpack.c.b16 %v851, %v850
      %v866 = vpack.c.b16 %v853, %v852
      %v867 = vpack.c.b16 %v855, %v854
      %v868 = vpack.c.b16 %v857, %v856
      %v869 = vpack.c.b16 %v859, %v858
      %v870 = vpack.c.b16 %v861, %v860
      %v871 = vpack.c.b16 %v863, %v862
      %880 = vmatprep.subr.bf16.mxu0 0
      %881 = vmatpush1.bf16.msra.mxu0 %v871
      %882 = vmatprep.subr.bf16.mxu0 0
      %883 = vmatpush1.bf16.msra.mxu0 %v870
      %884 = vmatprep.subr.bf16.mxu0 0
      %885 = vmatpush1.bf16.msra.mxu0 %v869
      %886 = vmatprep.subr.bf16.mxu0 0
      %887 = vmatpush1.bf16.msra.mxu0 %v868
      %888 = vmatprep.subr.bf16.mxu0 0
      %889 = vmatpush1.bf16.msra.mxu0 %v867
      %890 = vmatprep.subr.bf16.mxu0 0
      %891 = vmatpush1.bf16.msra.mxu0 %v866
      %892 = vmatprep.subr.bf16.mxu0 0
      %893 = vmatpush1.bf16.msra.mxu0 %v865
      %894 = vmatprep.subr.bf16.mxu0 0
      %895 = vmatpush1.bf16.msra.mxu0 %v864
      %896 = vmatprep.subr.bf16.mxu0 0
      %897 = vmatpush2.bf16.msra.mxu0 0
      %898 = vmatprep.subr.bf16.mxu0 0
      %899 = vmatpush2.bf16.msra.mxu0 0
      %900 = vmatprep.subr.bf16.mxu0 0
      %901 = vmatpush2.bf16.msra.mxu0 0
      %902 = vmatprep.subr.bf16.mxu0 0
      %903 = vmatpush2.bf16.msra.mxu0 0
      %904 = vmatprep.subr.bf16.mxu0 0
      %905 = vmatpush2.bf16.msra.mxu0 0
      %906 = vmatprep.subr.bf16.mxu0 0
      %907 = vmatpush2.bf16.msra.mxu0 0
      %908 = vmatprep.subr.bf16.mxu0 0
      %909 = vmatpush2.bf16.msra.mxu0 0
      %910 = vmatprep.subr.bf16.mxu0 0
      %911 = vmatpush2.bf16.msra.mxu0 0
      %912 = vmatprep.mubr.bf16.mxu0 0
      %913 = vmatmul.mubr.bf16.gmra.mxu0 %v808
      %v914 = vpop.f32.mrf.mxu0
      %v915 = vadd.f32 0.0, %v914
      %v916 = vpop.f32.mrf.mxu0
      %v917 = vpop.f32.mrf.mxu0
      %v918 = vadd.f32 0.0, %v917
      %v919 = vpop.f32.mrf.mxu0
      %920 = vmatprep.mubr.bf16.mxu0 0
      %921 = vmatmul.mubr.bf16.gmra.mxu0 %v809
      %v922 = vpop.f32.mrf.mxu0
      %v923 = vadd.f32 0.0, %v922
      %v924 = vpop.f32.mrf.mxu0
      %v925 = vpop.f32.mrf.mxu0
      %v926 = vadd.f32 0.0, %v925
      %v927 = vpop.f32.mrf.mxu0
      %928 = vmatprep.mubr.bf16.mxu0 0
      %929 = vmatmul.mubr.bf16.gmra.mxu0 %v810
      %v930 = vpop.f32.mrf.mxu0
      %v931 = vadd.f32 0.0, %v930
      %v932 = vpop.f32.mrf.mxu0
      %v933 = vpop.f32.mrf.mxu0
      %v934 = vadd.f32 0.0, %v933
      %v935 = vpop.f32.mrf.mxu0
      %936 = vmatprep.mubr.bf16.mxu0 0
      %937 = vmatmul.mubr.bf16.gmra.mxu0 %v811
      %v938 = vpop.f32.mrf.mxu0
      %v939 = vadd.f32 0.0, %v938
      %v940 = vpop.f32.mrf.mxu0
      %v941 = vpop.f32.mrf.mxu0
      %v942 = vadd.f32 0.0, %v941
      %v943 = vpop.f32.mrf.mxu0
      %944 = vmatprep.mubr.bf16.mxu0 0
      %945 = vmatmul.mubr.bf16.gmra.mxu0 %v812
      %v946 = vpop.f32.mrf.mxu0
      %v947 = vadd.f32 0.0, %v946
      %v948 = vpop.f32.mrf.mxu0
      %v949 = vpop.f32.mrf.mxu0
      %v950 = vadd.f32 0.0, %v949
      %v951 = vpop.f32.mrf.mxu0
      %952 = vmatprep.mubr.bf16.mxu0 0
      %953 = vmatmul.mubr.bf16.gmra.mxu0 %v813
      %v954 = vpop.f32.mrf.mxu0
      %v955 = vadd.f32 0.0, %v954
      %v956 = vpop.f32.mrf.mxu0
      %v957 = vpop.f32.mrf.mxu0
      %v958 = vadd.f32 0.0, %v957
      %v959 = vpop.f32.mrf.mxu0
      %960 = vmatprep.mubr.bf16.mxu0 0
      %961 = vmatmul.mubr.bf16.gmra.mxu0 %v814
      %v962 = vpop.f32.mrf.mxu0
      %v963 = vadd.f32 0.0, %v962
      %v964 = vpop.f32.mrf.mxu0
      %v965 = vpop.f32.mrf.mxu0
      %v966 = vadd.f32 0.0, %v965
      %v967 = vpop.f32.mrf.mxu0
      %968 = vmatprep.mubr.bf16.mxu0 0
      %969 = vmatmul.mubr.bf16.gmra.mxu0 %v815
      %v970 = vpop.f32.mrf.mxu0
      %v971 = vadd.f32 0.0, %v970
      %v972 = vpop.f32.mrf.mxu0
      %v973 = vpop.f32.mrf.mxu0
      %v974 = vadd.f32 0.0, %v973
      %v975 = vpop.f32.mrf.mxu0
      %976 = vdwg.mxu0
      %v993 = vunpack.c.l.b16 %v791
      %v994 = vunpack.c.l.b16 %v792
      %v995 = vunpack.c.l.b16 %v793
      %v996 = vunpack.c.l.b16 %v794
      %v997 = vunpack.c.l.b16 %v795
      %v998 = vunpack.c.l.b16 %v796
      %v999 = vunpack.c.l.b16 %v797
      %v1000 = vunpack.c.l.b16 %v798
      %v1001 = vunpack.c.l.b16 %v799
      %v1002 = vunpack.c.l.b16 %v800
      %v1003 = vunpack.c.l.b16 %v801
      %v1004 = vunpack.c.l.b16 %v802
      %v1005 = vunpack.c.l.b16 %v803
      %v1006 = vunpack.c.l.b16 %v804
      %v1007 = vunpack.c.l.b16 %v805
      %v1008 = vunpack.c.l.b16 %v806
      %v1009 = vpack.c.b16 %v994, %v993
      %v1010 = vpack.c.b16 %v996, %v995
      %v1011 = vpack.c.b16 %v998, %v997
      %v1012 = vpack.c.b16 %v1000, %v999
      %v1013 = vpack.c.b16 %v1002, %v1001
      %v1014 = vpack.c.b16 %v1004, %v1003
      %v1015 = vpack.c.b16 %v1006, %v1005
      %v1016 = vpack.c.b16 %v1008, %v1007
      %vm1017 = vcmask 64512
      %v1019 = vsel %vm1017, %v1009, 0
      %v1022 = vsel %vm1017, %v1010, 0
      %v1025 = vsel %vm1017, %v1011, 0
      %v1028 = vsel %vm1017, %v1012, 0
      %v1031 = vsel %vm1017, %v1013, 0
      %v1034 = vsel %vm1017, %v1014, 0
      %v1037 = vsel %vm1017, %v1015, 0
      %v1040 = vsel %vm1017, %v1016, 0
      %vm1042 = vcmask 1043456
      %v1044 = vsel %vm1042, %v807, 0
      %1046 = vmatprep.subr.bf16.mxu0 0
      %1047 = vmatpush1.bf16.msra.mxu0 0
      %1048 = vmatprep.subr.bf16.mxu0 0
      %1049 = vmatpush1.bf16.msra.mxu0 0
      %1050 = vmatprep.subr.bf16.mxu0 0
      %1051 = vmatpush1.bf16.msra.mxu0 0
      %1052 = vmatprep.subr.bf16.mxu0 0
      %1053 = vmatpush1.bf16.msra.mxu0 0
      %1054 = vmatprep.subr.bf16.mxu0 0
      %1055 = vmatpush1.bf16.msra.mxu0 0
      %1056 = vmatprep.subr.bf16.mxu0 0
      %1057 = vmatpush1.bf16.msra.mxu0 0
      %1058 = vmatprep.subr.bf16.mxu0 0
      %1059 = vmatpush1.bf16.msra.mxu0 0
      %1060 = vmatprep.subr.bf16.mxu0 0
      %1061 = vmatpush1.bf16.msra.mxu0 %v1044
      %1062 = vmatprep.subr.bf16.mxu0 0
      %1063 = vmatpush2.bf16.msra.mxu0 0
      %1064 = vmatprep.subr.bf16.mxu0 0
      %1065 = vmatpush2.bf16.msra.mxu0 0
      %1066 = vmatprep.subr.bf16.mxu0 0
      %1067 = vmatpush2.bf16.msra.mxu0 0
      %1068 = vmatprep.subr.bf16.mxu0 0
      %1069 = vmatpush2.bf16.msra.mxu0 0
      %1070 = vmatprep.subr.bf16.mxu0 0
      %1071 = vmatpush2.bf16.msra.mxu0 0
      %1072 = vmatprep.subr.bf16.mxu0 0
      %1073 = vmatpush2.bf16.msra.mxu0 0
      %1074 = vmatprep.subr.bf16.mxu0 0
      %1075 = vmatpush2.bf16.msra.mxu0 0
      %1076 = vmatprep.subr.bf16.mxu0 0
      %1077 = vmatpush2.bf16.msra.mxu0 0
      %1078 = vmatprep.mubr.bf16.mxu0 0
      %1079 = vmatmul.mubr.bf16.gmra.mxu0 %v1019
      %v1080 = vpop.f32.mrf.mxu0
      %v1081 = vadd.f32 %v915, %v1080
      %v1082 = vpop.f32.mrf.mxu0
      %v1083 = vpop.f32.mrf.mxu0
      %v1084 = vadd.f32 %v918, %v1083
      %v1085 = vpop.f32.mrf.mxu0
      %1086 = vmatprep.mubr.bf16.mxu0 0
      %1087 = vmatmul.mubr.bf16.gmra.mxu0 %v1022
      %v1088 = vpop.f32.mrf.mxu0
      %v1089 = vadd.f32 %v923, %v1088
      %v1090 = vpop.f32.mrf.mxu0
      %v1091 = vpop.f32.mrf.mxu0
      %v1092 = vadd.f32 %v926, %v1091
      %v1093 = vpop.f32.mrf.mxu0
      %1094 = vmatprep.mubr.bf16.mxu0 0
      %1095 = vmatmul.mubr.bf16.gmra.mxu0 %v1025
      %v1096 = vpop.f32.mrf.mxu0
      %v1097 = vadd.f32 %v931, %v1096
      %v1098 = vpop.f32.mrf.mxu0
      %v1099 = vpop.f32.mrf.mxu0
      %v1100 = vadd.f32 %v934, %v1099
      %v1101 = vpop.f32.mrf.mxu0
      %1102 = vmatprep.mubr.bf16.mxu0 0
      %1103 = vmatmul.mubr.bf16.gmra.mxu0 %v1028
      %v1104 = vpop.f32.mrf.mxu0
      %v1105 = vadd.f32 %v939, %v1104
      %v1106 = vpop.f32.mrf.mxu0
      %v1107 = vpop.f32.mrf.mxu0
      %v1108 = vadd.f32 %v942, %v1107
      %v1109 = vpop.f32.mrf.mxu0
      %1110 = vmatprep.mubr.bf16.mxu0 0
      %1111 = vmatmul.mubr.bf16.gmra.mxu0 %v1031
      %v1112 = vpop.f32.mrf.mxu0
      %v1113 = vadd.f32 %v947, %v1112
      %v1114 = vpop.f32.mrf.mxu0
      %v1115 = vpop.f32.mrf.mxu0
      %v1116 = vadd.f32 %v950, %v1115
      %v1117 = vpop.f32.mrf.mxu0
      %1118 = vmatprep.mubr.bf16.mxu0 0
      %1119 = vmatmul.mubr.bf16.gmra.mxu0 %v1034
      %v1120 = vpop.f32.mrf.mxu0
      %v1121 = vadd.f32 %v955, %v1120
      %v1122 = vpop.f32.mrf.mxu0
      %v1123 = vpop.f32.mrf.mxu0
      %v1124 = vadd.f32 %v958, %v1123
      %v1125 = vpop.f32.mrf.mxu0
      %1126 = vmatprep.mubr.bf16.mxu0 0
      %1127 = vmatmul.mubr.bf16.gmra.mxu0 %v1037
      %v1128 = vpop.f32.mrf.mxu0
      %v1129 = vadd.f32 %v963, %v1128
      %v1130 = vpop.f32.mrf.mxu0
      %v1131 = vpop.f32.mrf.mxu0
      %v1132 = vadd.f32 %v966, %v1131
      %v1133 = vpop.f32.mrf.mxu0
      %1134 = vmatprep.mubr.bf16.mxu0 0
      %1135 = vmatmul.mubr.bf16.gmra.mxu0 %v1040
      %v1136 = vpop.f32.mrf.mxu0
      %v1137 = vadd.f32 %v971, %v1136
      %v1138 = vpop.f32.mrf.mxu0
      %v1139 = vpop.f32.mrf.mxu0
      %v1140 = vadd.f32 %v974, %v1139
      %v1141 = vpop.f32.mrf.mxu0
      %1142 = vdwg.mxu0
      %v1143 = vld [vmem:[%s5] sm:$0x1]
      %v1145 = vlaneseq
      %v1146 = vshrl.u32 %v1145, 7
      %v1147 = vsub.s32 0, %v1146
      %v1148 = vrot.slane %v1143, %v1147
      %v1150 = vadd.f32 %v1081, %v1148
      %v1151 = vadd.f32 %v1084, %v1148
      %v1152 = vadd.f32 %v1089, %v1148
      %v1153 = vadd.f32 %v1092, %v1148
      %v1154 = vadd.f32 %v1097, %v1148
      %v1155 = vadd.f32 %v1100, %v1148
      %v1156 = vadd.f32 %v1105, %v1148
      %v1157 = vadd.f32 %v1108, %v1148
      %v1158 = vadd.f32 %v1113, %v1148
      %v1159 = vadd.f32 %v1116, %v1148
      %v1160 = vadd.f32 %v1121, %v1148
      %v1161 = vadd.f32 %v1124, %v1148
      %v1162 = vadd.f32 %v1129, %v1148
      %v1163 = vadd.f32 %v1132, %v1148
      %v1164 = vadd.f32 %v1137, %v1148
      %v1165 = vadd.f32 %v1140, %v1148
      %v1166 = vmax.f32 %v1150, 0.0
      %v1167 = vmax.f32 %v1151, 0.0
      %v1168 = vmax.f32 %v1152, 0.0
      %v1169 = vmax.f32 %v1153, 0.0
      %v1170 = vmax.f32 %v1154, 0.0
      %v1171 = vmax.f32 %v1155, 0.0
      %v1172 = vmax.f32 %v1156, 0.0
      %v1173 = vmax.f32 %v1157, 0.0
      %v1174 = vmax.f32 %v1158, 0.0
      %v1175 = vmax.f32 %v1159, 0.0
      %v1176 = vmax.f32 %v1160, 0.0
      %v1177 = vmax.f32 %v1161, 0.0
      %v1178 = vmax.f32 %v1162, 0.0
      %v1179 = vmax.f32 %v1163, 0.0
      %v1180 = vmax.f32 %v1164, 0.0
      %v1181 = vmax.f32 %v1165, 0.0
      %v1182 = vpack.c.bf16 %v1167, %v1166
      %v1183 = vpack.c.bf16 %v1169, %v1168
      %v1184 = vpack.c.bf16 %v1171, %v1170
      %v1185 = vpack.c.bf16 %v1173, %v1172
      %v1186 = vpack.c.bf16 %v1175, %v1174
      %v1187 = vpack.c.bf16 %v1177, %v1176
      %v1188 = vpack.c.bf16 %v1179, %v1178
      %v1189 = vpack.c.bf16 %v1181, %v1180
      %v1190 = vld [vmem:[%s6] sm:$0xf]
      %v1191 = vld [vmem:[%s6 + $0x4] sm:$0xf]
      %v1192 = vld [vmem:[%s6 + $0x8] sm:$0xf]
      %v1193 = vld [vmem:[%s6 + $0xc] sm:$0xf]
      %v1194 = vld [vmem:[%s6 + $0x10] sm:$0xf]
      %v1195 = vld [vmem:[%s6 + $0x14] sm:$0xf]
      %v1196 = vld [vmem:[%s6 + $0x18] sm:$0xf]
      %v1197 = vld [vmem:[%s6 + $0x1c] sm:$0xf]
      %v1198 = vld [vmem:[%s7] sm:$0x1]
      %v1200 = vlaneseq
      %v1201 = vshrl.u32 %v1200, 7
      %v1202 = vsub.s32 0, %v1201
      %v1203 = vrot.slane %v1198, %v1202
      %v1213 = vunpack.c.l.b16 %v1190
      %v1214 = vunpack.c.l.b16 %v1191
      %v1215 = vunpack.c.l.b16 %v1192
      %v1216 = vunpack.c.l.b16 %v1193
      %v1217 = vunpack.c.l.b16 %v1194
      %v1218 = vunpack.c.l.b16 %v1195
      %v1219 = vunpack.c.l.b16 %v1196
      %v1220 = vunpack.c.l.b16 %v1197
      %v1221 = vpack.c.b16 %v1214, %v1213
      %v1222 = vpack.c.b16 %v1216, %v1215
      %v1223 = vpack.c.b16 %v1218, %v1217
      %v1224 = vpack.c.b16 %v1220, %v1219
      %vm1229 = vcmask 523264
      %v1231 = vsel %vm1229, %v1182, 0
      %v1234 = vsel %vm1229, %v1183, 0
      %v1237 = vsel %vm1229, %v1184, 0
      %v1240 = vsel %vm1229, %v1185, 0
      %v1243 = vsel %vm1229, %v1186, 0
      %v1246 = vsel %vm1229, %v1187, 0
      %v1249 = vsel %vm1229, %v1188, 0
      %v1252 = vsel %vm1229, %v1189, 0
      %1254 = vmatprep.subr.bf16.mxu0 0
      %1255 = vmatpush1.bf16.msra.mxu0 0
      %1256 = vmatprep.subr.bf16.mxu0 0
      %1257 = vmatpush1.bf16.msra.mxu0 0
      %1258 = vmatprep.subr.bf16.mxu0 0
      %1259 = vmatpush1.bf16.msra.mxu0 0
      %1260 = vmatprep.subr.bf16.mxu0 0
      %1261 = vmatpush1.bf16.msra.mxu0 0
      %1262 = vmatprep.subr.bf16.mxu0 0
      %1263 = vmatpush1.bf16.msra.mxu0 %v1224
      %1264 = vmatprep.subr.bf16.mxu0 0
      %1265 = vmatpush1.bf16.msra.mxu0 %v1223
      %1266 = vmatprep.subr.bf16.mxu0 0
      %1267 = vmatpush1.bf16.msra.mxu0 %v1222
      %1268 = vmatprep.subr.bf16.mxu0 0
      %1269 = vmatpush1.bf16.msra.mxu0 %v1221
      %1270 = vmatprep.subr.bf16.mxu0 0
      %1271 = vmatpush2.bf16.msra.mxu0 0
      %1272 = vmatprep.subr.bf16.mxu0 0
      %1273 = vmatpush2.bf16.msra.mxu0 0
      %1274 = vmatprep.subr.bf16.mxu0 0
      %1275 = vmatpush2.bf16.msra.mxu0 0
      %1276 = vmatprep.subr.bf16.mxu0 0
      %1277 = vmatpush2.bf16.msra.mxu0 0
      %1278 = vmatprep.subr.bf16.mxu0 0
      %1279 = vmatpush2.bf16.msra.mxu0 0
      %1280 = vmatprep.subr.bf16.mxu0 0
      %1281 = vmatpush2.bf16.msra.mxu0 0
      %1282 = vmatprep.subr.bf16.mxu0 0
      %1283 = vmatpush2.bf16.msra.mxu0 0
      %1284 = vmatprep.subr.bf16.mxu0 0
      %1285 = vmatpush2.bf16.msra.mxu0 0
      %1286 = vmatprep.mubr.bf16.mxu0 0
      %1287 = vmatmul.mubr.bf16.gmra.mxu0 %v1231
      %v1288 = vpop.f32.mrf.mxu0
      %v1289 = vadd.f32 %v1203, %v1288
      %v1290 = vpop.f32.mrf.mxu0
      %v1291 = vpop.f32.mrf.mxu0
      %v1292 = vadd.f32 %v1203, %v1291
      %v1293 = vpop.f32.mrf.mxu0
      %1294 = vmatprep.mubr.bf16.mxu0 0
      %1295 = vmatmul.mubr.bf16.gmra.mxu0 %v1234
      %v1296 = vpop.f32.mrf.mxu0
      %v1297 = vadd.f32 %v1203, %v1296
      %v1298 = vpop.f32.mrf.mxu0
      %v1299 = vpop.f32.mrf.mxu0
      %v1300 = vadd.f32 %v1203, %v1299
      %v1301 = vpop.f32.mrf.mxu0
      %1302 = vmatprep.mubr.bf16.mxu0 0
      %1303 = vmatmul.mubr.bf16.gmra.mxu0 %v1237
      %v1304 = vpop.f32.mrf.mxu0
      %v1305 = vadd.f32 %v1203, %v1304
      %v1306 = vpop.f32.mrf.mxu0
      %v1307 = vpop.f32.mrf.mxu0
      %v1308 = vadd.f32 %v1203, %v1307
      %v1309 = vpop.f32.mrf.mxu0
      %1310 = vmatprep.mubr.bf16.mxu0 0
      %1311 = vmatmul.mubr.bf16.gmra.mxu0 %v1240
      %v1312 = vpop.f32.mrf.mxu0
      %v1313 = vadd.f32 %v1203, %v1312
      %v1314 = vpop.f32.mrf.mxu0
      %v1315 = vpop.f32.mrf.mxu0
      %v1316 = vadd.f32 %v1203, %v1315
      %v1317 = vpop.f32.mrf.mxu0
      %1318 = vmatprep.mubr.bf16.mxu0 0
      %1319 = vmatmul.mubr.bf16.gmra.mxu0 %v1243
      %v1320 = vpop.f32.mrf.mxu0
      %v1321 = vadd.f32 %v1203, %v1320
      %v1322 = vpop.f32.mrf.mxu0
      %v1323 = vpop.f32.mrf.mxu0
      %v1324 = vadd.f32 %v1203, %v1323
      %v1325 = vpop.f32.mrf.mxu0
      %1326 = vmatprep.mubr.bf16.mxu0 0
      %1327 = vmatmul.mubr.bf16.gmra.mxu0 %v1246
      %v1328 = vpop.f32.mrf.mxu0
      %v1329 = vadd.f32 %v1203, %v1328
      %v1330 = vpop.f32.mrf.mxu0
      %v1331 = vpop.f32.mrf.mxu0
      %v1332 = vadd.f32 %v1203, %v1331
      %v1333 = vpop.f32.mrf.mxu0
      %1334 = vmatprep.mubr.bf16.mxu0 0
      %1335 = vmatmul.mubr.bf16.gmra.mxu0 %v1249
      %v1336 = vpop.f32.mrf.mxu0
      %v1337 = vadd.f32 %v1203, %v1336
      %v1338 = vpop.f32.mrf.mxu0
      %v1339 = vpop.f32.mrf.mxu0
      %v1340 = vadd.f32 %v1203, %v1339
      %v1341 = vpop.f32.mrf.mxu0
      %1342 = vmatprep.mubr.bf16.mxu0 0
      %1343 = vmatmul.mubr.bf16.gmra.mxu0 %v1252
      %v1344 = vpop.f32.mrf.mxu0
      %v1345 = vadd.f32 %v1203, %v1344
      %v1346 = vpop.f32.mrf.mxu0
      %v1347 = vpop.f32.mrf.mxu0
      %v1348 = vadd.f32 %v1203, %v1347
      %v1349 = vpop.f32.mrf.mxu0
      %1350 = vdwg.mxu0
      %v1351 = vmax.f32 %v1289, 0.0
      %v1352 = vmax.f32 %v1292, 0.0
      %v1353 = vmax.f32 %v1297, 0.0
      %v1354 = vmax.f32 %v1300, 0.0
      %v1355 = vmax.f32 %v1305, 0.0
      %v1356 = vmax.f32 %v1308, 0.0
      %v1357 = vmax.f32 %v1313, 0.0
      %v1358 = vmax.f32 %v1316, 0.0
      %v1359 = vmax.f32 %v1321, 0.0
      %v1360 = vmax.f32 %v1324, 0.0
      %v1361 = vmax.f32 %v1329, 0.0
      %v1362 = vmax.f32 %v1332, 0.0
      %v1363 = vmax.f32 %v1337, 0.0
      %v1364 = vmax.f32 %v1340, 0.0
      %v1365 = vmax.f32 %v1345, 0.0
      %v1366 = vmax.f32 %v1348, 0.0
      %v1367 = vld [vmem:[%s8] sm:$0x1]
      %v1369 = vlaneseq
      %v1370 = vshrl.u32 %v1369, 7
      %v1371 = vsub.s32 0, %v1370
      %v1372 = vrot.slane %v1367, %v1371
      %v1374 = vmul.f32 %v1351, %v1372
      %v1375 = vmul.f32 %v1352, %v1372
      %v1376 = vmul.f32 %v1353, %v1372
      %v1377 = vmul.f32 %v1354, %v1372
      %v1378 = vmul.f32 %v1355, %v1372
      %v1379 = vmul.f32 %v1356, %v1372
      %v1380 = vmul.f32 %v1357, %v1372
      %v1381 = vmul.f32 %v1358, %v1372
      %v1382 = vmul.f32 %v1359, %v1372
      %v1383 = vmul.f32 %v1360, %v1372
      %v1384 = vmul.f32 %v1361, %v1372
      %v1385 = vmul.f32 %v1362, %v1372
      %v1386 = vmul.f32 %v1363, %v1372
      %v1387 = vmul.f32 %v1364, %v1372
      %v1388 = vmul.f32 %v1365, %v1372
      %v1389 = vmul.f32 %v1366, %v1372
      %vm1390 = vcmask 261120
      %v1391 = vsel %vm1390, %v1374, 0.0
      %1392 = vadd.xlane.f32.xlu0 %v1391
      %v1393 = vpop.xlane.xlu0 %1392
      %v1394 = vsel %vm1390, %v1375, 0.0
      %1395 = vadd.xlane.f32.xlu0 %v1394
      %v1396 = vpop.xlane.xlu0 %1395
      %v1397 = vsel %vm1390, %v1376, 0.0
      %1398 = vadd.xlane.f32.xlu0 %v1397
      %v1399 = vpop.xlane.xlu0 %1398
      %v1400 = vsel %vm1390, %v1377, 0.0
      %1401 = vadd.xlane.f32.xlu0 %v1400
      %v1402 = vpop.xlane.xlu0 %1401
      %v1403 = vsel %vm1390, %v1378, 0.0
      %1404 = vadd.xlane.f32.xlu0 %v1403
      %v1405 = vpop.xlane.xlu0 %1404
      %v1406 = vsel %vm1390, %v1379, 0.0
      %1407 = vadd.xlane.f32.xlu0 %v1406
      %v1408 = vpop.xlane.xlu0 %1407
      %v1409 = vsel %vm1390, %v1380, 0.0
      %1410 = vadd.xlane.f32.xlu0 %v1409
      %v1411 = vpop.xlane.xlu0 %1410
      %v1412 = vsel %vm1390, %v1381, 0.0
      %1413 = vadd.xlane.f32.xlu0 %v1412
      %v1414 = vpop.xlane.xlu0 %1413
      %v1415 = vsel %vm1390, %v1382, 0.0
      %1416 = vadd.xlane.f32.xlu0 %v1415
      %v1417 = vpop.xlane.xlu0 %1416
      %v1418 = vsel %vm1390, %v1383, 0.0
      %1419 = vadd.xlane.f32.xlu0 %v1418
      %v1420 = vpop.xlane.xlu0 %1419
      %v1421 = vsel %vm1390, %v1384, 0.0
      %1422 = vadd.xlane.f32.xlu0 %v1421
      %v1423 = vpop.xlane.xlu0 %1422
      %v1424 = vsel %vm1390, %v1385, 0.0
      %1425 = vadd.xlane.f32.xlu0 %v1424
      %v1426 = vpop.xlane.xlu0 %1425
      %v1427 = vsel %vm1390, %v1386, 0.0
      %1428 = vadd.xlane.f32.xlu0 %v1427
      %v1429 = vpop.xlane.xlu0 %1428
      %v1430 = vsel %vm1390, %v1387, 0.0
      %1431 = vadd.xlane.f32.xlu0 %v1430
      %v1432 = vpop.xlane.xlu0 %1431
      %v1433 = vsel %vm1390, %v1388, 0.0
      %1434 = vadd.xlane.f32.xlu0 %v1433
      %v1435 = vpop.xlane.xlu0 %1434
      %v1436 = vsel %vm1390, %v1389, 0.0
      %1437 = vadd.xlane.f32.xlu0 %v1436
      %v1438 = vpop.xlane.xlu0 %1437
      %v1439 = vld [vmem:[%s416] sm:$0xff]
      %v1440 = vld [vmem:[%s416 + $0x8] sm:$0xff]
      %v1441 = vld [vmem:[%s416 + $0x10] sm:$0xff]
      %v1442 = vld [vmem:[%s416 + $0x18] sm:$0xff]
      %v1443 = vld [vmem:[%s416 + $0x20] sm:$0xff]
      %v1444 = vld [vmem:[%s416 + $0x28] sm:$0xff]
      %v1445 = vld [vmem:[%s416 + $0x30] sm:$0xff]
      %v1446 = vld [vmem:[%s416 + $0x38] sm:$0xff]
      %v1447 = vld [vmem:[%s416 + $0x40] sm:$0xff]
      %v1448 = vld [vmem:[%s416 + $0x48] sm:$0xff]
      %v1449 = vld [vmem:[%s416 + $0x50] sm:$0xff]
      %v1450 = vld [vmem:[%s416 + $0x58] sm:$0xff]
      %v1451 = vld [vmem:[%s416 + $0x60] sm:$0xff]
      %v1452 = vld [vmem:[%s416 + $0x68] sm:$0xff]
      %v1453 = vld [vmem:[%s416 + $0x70] sm:$0xff]
      %v1454 = vld [vmem:[%s416 + $0x78] sm:$0xff]
      %v1455 = vld [vmem:[%s9] sm:$0x1]
      %v1457 = vlaneseq
      %v1458 = vshrl.u32 %v1457, 7
      %v1459 = vsub.s32 0, %v1458
      %v1460 = vrot.slane %v1455, %v1459
      %v1462 = vmul.f32 %v1439, %v1460
      %v1463 = vmul.f32 %v1440, %v1460
      %v1464 = vmul.f32 %v1441, %v1460
      %v1465 = vmul.f32 %v1442, %v1460
      %v1466 = vmul.f32 %v1443, %v1460
      %v1467 = vmul.f32 %v1444, %v1460
      %v1468 = vmul.f32 %v1445, %v1460
      %v1469 = vmul.f32 %v1446, %v1460
      %v1470 = vmul.f32 %v1447, %v1460
      %v1471 = vmul.f32 %v1448, %v1460
      %v1472 = vmul.f32 %v1449, %v1460
      %v1473 = vmul.f32 %v1450, %v1460
      %v1474 = vmul.f32 %v1451, %v1460
      %v1475 = vmul.f32 %v1452, %v1460
      %v1476 = vmul.f32 %v1453, %v1460
      %v1477 = vmul.f32 %v1454, %v1460
      %vm1478 = vcmask 130048
      %v1479 = vsel %vm1478, %v1462, 0.0
      %1480 = vadd.xlane.f32.xlu0 %v1479
      %v1481 = vpop.xlane.xlu0 %1480
      %v1482 = vsel %vm1478, %v1463, 0.0
      %1483 = vadd.xlane.f32.xlu0 %v1482
      %v1484 = vpop.xlane.xlu0 %1483
      %v1485 = vsel %vm1478, %v1464, 0.0
      %1486 = vadd.xlane.f32.xlu0 %v1485
      %v1487 = vpop.xlane.xlu0 %1486
      %v1488 = vsel %vm1478, %v1465, 0.0
      %1489 = vadd.xlane.f32.xlu0 %v1488
      %v1490 = vpop.xlane.xlu0 %1489
      %v1491 = vsel %vm1478, %v1466, 0.0
      %1492 = vadd.xlane.f32.xlu0 %v1491
      %v1493 = vpop.xlane.xlu0 %1492
      %v1494 = vsel %vm1478, %v1467, 0.0
      %1495 = vadd.xlane.f32.xlu0 %v1494
      %v1496 = vpop.xlane.xlu0 %1495
      %v1497 = vsel %vm1478, %v1468, 0.0
      %1498 = vadd.xlane.f32.xlu0 %v1497
      %v1499 = vpop.xlane.xlu0 %1498
      %v1500 = vsel %vm1478, %v1469, 0.0
      %1501 = vadd.xlane.f32.xlu0 %v1500
      %v1502 = vpop.xlane.xlu0 %1501
      %v1503 = vsel %vm1478, %v1470, 0.0
      %1504 = vadd.xlane.f32.xlu0 %v1503
      %v1505 = vpop.xlane.xlu0 %1504
      %v1506 = vsel %vm1478, %v1471, 0.0
      %1507 = vadd.xlane.f32.xlu0 %v1506
      %v1508 = vpop.xlane.xlu0 %1507
      %v1509 = vsel %vm1478, %v1472, 0.0
      %1510 = vadd.xlane.f32.xlu0 %v1509
      %v1511 = vpop.xlane.xlu0 %1510
      %v1512 = vsel %vm1478, %v1473, 0.0
      %1513 = vadd.xlane.f32.xlu0 %v1512
      %v1514 = vpop.xlane.xlu0 %1513
      %v1515 = vsel %vm1478, %v1474, 0.0
      %1516 = vadd.xlane.f32.xlu0 %v1515
      %v1517 = vpop.xlane.xlu0 %1516
      %v1518 = vsel %vm1478, %v1475, 0.0
      %1519 = vadd.xlane.f32.xlu0 %v1518
      %v1520 = vpop.xlane.xlu0 %1519
      %v1521 = vsel %vm1478, %v1476, 0.0
      %1522 = vadd.xlane.f32.xlu0 %v1521
      %v1523 = vpop.xlane.xlu0 %1522
      %v1524 = vsel %vm1478, %v1477, 0.0
      %1525 = vadd.xlane.f32.xlu0 %v1524
      %v1526 = vpop.xlane.xlu0 %1525
      %v1527 = vadd.f32 %v1481, %v1393
      %v1528 = vadd.f32 %v1484, %v1396
      %v1529 = vadd.f32 %v1487, %v1399
      %v1530 = vadd.f32 %v1490, %v1402
      %v1531 = vadd.f32 %v1493, %v1405
      %v1532 = vadd.f32 %v1496, %v1408
      %v1533 = vadd.f32 %v1499, %v1411
      %v1534 = vadd.f32 %v1502, %v1414
      %v1535 = vadd.f32 %v1505, %v1417
      %v1536 = vadd.f32 %v1508, %v1420
      %v1537 = vadd.f32 %v1511, %v1423
      %v1538 = vadd.f32 %v1514, %v1426
      %v1539 = vadd.f32 %v1517, %v1429
      %v1540 = vadd.f32 %v1520, %v1432
      %v1541 = vadd.f32 %v1523, %v1435
      %v1542 = vadd.f32 %v1526, %v1438
      %v1543 = vld [vmem:[#allocation2] sm:$0x1]
      %v1545 = vlaneseq
      %v1546 = vshrl.u32 %v1545, 7
      %v1547 = vsub.s32 0, %v1546
      %v1548 = vrot.slane %v1543, %v1547
      %v1550 = vadd.f32 %v1527, %v1548
      %v1551 = vadd.f32 %v1528, %v1548
      %v1552 = vadd.f32 %v1529, %v1548
      %v1553 = vadd.f32 %v1530, %v1548
      %v1554 = vadd.f32 %v1531, %v1548
      %v1555 = vadd.f32 %v1532, %v1548
      %v1556 = vadd.f32 %v1533, %v1548
      %v1557 = vadd.f32 %v1534, %v1548
      %v1558 = vadd.f32 %v1535, %v1548
      %v1559 = vadd.f32 %v1536, %v1548
      %v1560 = vadd.f32 %v1537, %v1548
      %v1561 = vadd.f32 %v1538, %v1548
      %v1562 = vadd.f32 %v1539, %v1548
      %v1563 = vadd.f32 %v1540, %v1548
      %v1564 = vadd.f32 %v1541, %v1548
      %v1565 = vadd.f32 %v1542, %v1548
      %vm1566 = vcmask 7168
      %1567 = vst.msk [vmem:[%s434] sm:$0xff] %vm1566, %v1550
      %1568 = vst.msk [vmem:[%s434 + $0x8] sm:$0xff] %vm1566, %v1551
      %1569 = vst.msk [vmem:[%s434 + $0x10] sm:$0xff] %vm1566, %v1552
      %1570 = vst.msk [vmem:[%s434 + $0x18] sm:$0xff] %vm1566, %v1553
      %1571 = vst.msk [vmem:[%s434 + $0x20] sm:$0xff] %vm1566, %v1554
      %1572 = vst.msk [vmem:[%s434 + $0x28] sm:$0xff] %vm1566, %v1555
      %1573 = vst.msk [vmem:[%s434 + $0x30] sm:$0xff] %vm1566, %v1556
      %1574 = vst.msk [vmem:[%s434 + $0x38] sm:$0xff] %vm1566, %v1557
      %1575 = vst.msk [vmem:[%s434 + $0x40] sm:$0xff] %vm1566, %v1558
      %1576 = vst.msk [vmem:[%s434 + $0x48] sm:$0xff] %vm1566, %v1559
      %1577 = vst.msk [vmem:[%s434 + $0x50] sm:$0xff] %vm1566, %v1560
      %1578 = vst.msk [vmem:[%s434 + $0x58] sm:$0xff] %vm1566, %v1561
      %1579 = vst.msk [vmem:[%s434 + $0x60] sm:$0xff] %vm1566, %v1562
      %1580 = vst.msk [vmem:[%s434 + $0x68] sm:$0xff] %vm1566, %v1563
      %1581 = vst.msk [vmem:[%s434 + $0x70] sm:$0xff] %vm1566, %v1564
      %1582 = vst.msk [vmem:[%s434 + $0x78] sm:$0xff] %vm1566, %v1565
      %s1583 = smul.u32 16, %s24
      %p1584 = scmp.lt.s32.totalorder %s1583, 31
      %s1585 = scalar_select %p1584, %s1583, 31
      %s1586 = smul.addr %s1585, 8
      %s1587 = scalar_lea.vmem %s11, %s1586
      // Predicated region
      $region65: #{widedeep_forward.1} parent=63 // pred_check
        %p1588 = pneg %p288
      $region66: #{widedeep_forward.1} parent=63 // pred_check_branch
        %1590 = sbr.rel (%p1588) target = $region68
      $region67: #{widedeep_forward.1} parent=63 // pred_region
        %s1591 = smul.u32 16, %s24
      $region68: #{widedeep_forward.1} parent=63 // pred_fallthru
        _
    $region64: #{widedeep_forward.1} parent=5 // pred_fallthru
      _
    %p1592 = scmp.le.s32.totalorder 2, %s19
    // Predicated region
    $region69: #{widedeep_forward.1} parent=5 // pred_check
      %p1593 = pneg %p1592
    $region70: #{widedeep_forward.1} parent=5 // pred_check_branch
      %1595 = sbr.rel (%p1593) target = $region72
    $region71: #{widedeep_forward.1} parent=5 // pred_region
      %s1596 = ssub.s32 %s19, 2
      // Predicated region
      $region73: #{widedeep_forward.1} parent=71 // pred_check
        %p1597 = pneg %p294
      $region74: #{widedeep_forward.1} parent=71 // pred_check_branch
        %1599 = sbr.rel (%p1597) target = $region76
      $region75: #{widedeep_forward.1} parent=71 // pred_region
        %s1600 = smul.u32 16, %s25
        %p1601 = scmp.lt.s32.totalorder %s1600, 31
        %s1602 = scalar_select %p1601, %s1600, 31
        %s1603 = smul.addr %s1602, 8
        %s1604 = scalar_lea.vmem %s11, %s1603
      $region76: #{widedeep_forward.1} parent=71 // pred_fallthru
        _
    $region72: #{widedeep_forward.1} parent=5 // pred_fallthru
      _
  $region6: #{widedeep_forward.1} parent=0 // loop_footer
    %s23 = sadd.s32 1, %s19
  $region7: #{widedeep_forward.1} parent=0 // loop_footer_branch
    %18 = sbr.rel target = $region3
  $region8: #{widedeep_forward.1} parent=0 // loop_exit
    _

</llo_original>
